<compile_context>
chip_gen: v7x
topology: tpu7x:2x2x1
jax: 0.10.0
libtpu: 0.0.40
codegen_flags: <defaults>
</compile_context>

<pallas_src>
import functools

import jax
import jax.numpy as jnp
from jax.experimental import pallas as pl
from jax.experimental.pallas import tpu as pltpu


def _round_up(x, m):
    return ((x + m - 1) // m) * m


def _choose_tiling(b, block_m):
    """Pick (block_rows, padded_rows, num_blocks) for the batch axis."""
    b8 = _round_up(max(b, 1), 8)
    small = min(block_m, 256)
    if b8 <= small:
        # Tiny batch: one block; the kernel is a pure weight-DMA floor here.
        return b8, b8, 1
    # Large batch: at least 2 blocks (v7x megacore), even split to minimize
    # row-padding waste for batch sizes just above a block boundary.
    nblk = max(2, -(-b8 // block_m))
    bm = _round_up(-(-b8 // nblk), 8)
    nblk = -(-b8 // bm)
    return bm, bm * nblk, nblk


# ----------------------------------------------------------------------------
# Fused MLP kernel: fc1 -> relu -> fc2 -> relu -> fused {mean | clamped log_std}
# ----------------------------------------------------------------------------
def _dactor_kernel(x_ref, w1_ref, b1_ref, w2_ref, b2_ref, wh_ref, bh_ref,
                   out_ref, *, log_std_min, log_std_max, head_pad):
    # fc1: keep the LHS in the caller's dtype (f32) for policy fidelity; the
    # bf16 weight is promoted in-register, accumulation is f32 either way.
    x = x_ref[...]
    h = jnp.dot(x, w1_ref[...], preferred_element_type=jnp.float32) + b1_ref[...]
    h = jnp.maximum(h, 0.0).astype(jnp.bfloat16)

    # fc2: bf16 x bf16 on the MXU, f32 accumulation.
    h = jnp.dot(h, w2_ref[...], preferred_element_type=jnp.float32) + b2_ref[...]
    h = jnp.maximum(h, 0.0).astype(jnp.bfloat16)

    # Fused heads: one 2*head_pad-wide matmul (full 256-lane MXU on v6e/v7x).
    y = jnp.dot(h, wh_ref[...], preferred_element_type=jnp.float32) + bh_ref[...]

    # mean goes out untouched; log_std half gets clamped. Both stores are
    # 128-lane-aligned slabs of the same output ref -> unmasked vst.
    out_ref[:, :head_pad] = y[:, :head_pad]
    out_ref[:, head_pad:] = jnp.clip(y[:, head_pad:], log_std_min, log_std_max)


def dactor_forward(params, state, *, log_std_min, log_std_max, action_dim,
                   block_m=512):
    b, d = state.shape
    w1, b1 = params["w1"], params["b1"]
    w2, b2 = params["w2"], params["b2"]
    wh, bh = params["wh"], params["bh"]
    head_pad = wh.shape[1] // 2                 # 128-lane padded per-head width

    bm, padded_b, nblk = _choose_tiling(b, block_m)
    if padded_b != b:
        state = jnp.pad(state, ((0, padded_b - b), (0, 0)))

    row_map = lambda i: (i, 0)                  # tiles over the batch axis
    rep_map = lambda i: (0, 0)                  # weights/biases: resident block

    def full(a):
        return pl.BlockSpec(a.shape, rep_map)

    weight_bytes = sum(int(a.size) * a.dtype.itemsize
                       for a in (w1, b1, w2, b2, wh, bh))
    flops = 2 * padded_b * (d * w1.shape[1]
                            + w1.shape[1] * w2.shape[1]
                            + w2.shape[1] * wh.shape[1])
    bytes_accessed = (weight_bytes
                      + int(state.dtype.itemsize) * padded_b * d   # state in
                      + 4 * padded_b * 2 * head_pad)               # packed out

    kernel = functools.partial(_dactor_kernel,
                               log_std_min=float(log_std_min),
                               log_std_max=float(log_std_max),
                               head_pad=head_pad)

    out = pl.pallas_call(
        kernel,
        grid=(nblk,),
        in_specs=[
            pl.BlockSpec((bm, d), row_map),
            full(w1), full(b1),
            full(w2), full(b2),
            full(wh), full(bh),
        ],
        out_specs=pl.BlockSpec((bm, 2 * head_pad), row_map),
        out_shape=jax.ShapeDtypeStruct((padded_b, 2 * head_pad), jnp.float32),
        compiler_params=pltpu.CompilerParams(
            dimension_semantics=("parallel",)),      # >=2 steps -> v7x megacore
        cost_estimate=pl.CostEstimate(flops=flops, transcendentals=0,
                                      bytes_accessed=bytes_accessed),
    )(state, w1, b1, w2, b2, wh, bh)

    # Slice the packed (mean | log_std) slab and row/lane padding back off.
    mean = out[:b, :action_dim]
    log_std = out[:b, head_pad:head_pad + action_dim]
    return mean, log_std


# ----------------------------------------------------------------------------
# Deterministic parameter init (synthetic; matches nn.Linear layout semantics:
# weights stored transposed as (in_features, out_features) so kernels do x@W+b).
# The two output heads are packed side-by-side into one lane-padded weight.
# ----------------------------------------------------------------------------
def init_params(seed, action_dim):
    head_pad = _round_up(max(action_dim, 1), 128)   # lane-dense per-head width
    keys = jax.random.split(jax.random.PRNGKey(seed), 8)

    def lin(kw, kb, fan_in, fan_out):
        s = 1.0 / jnp.sqrt(fan_in)
        w = jax.random.uniform(kw, (fan_in, fan_out), jnp.float32, -s, s)
        b = jax.random.uniform(kb, (1, fan_out), jnp.float32, -s, s)
        return w, b

    w1, b1 = lin(keys[0], keys[1], 32 * 32, 512)
    w2, b2 = lin(keys[2], keys[3], 512, 256)
    wm, bm_ = lin(keys[4], keys[5], 256, action_dim)
    ws, bs_ = lin(keys[6], keys[7], 256, action_dim)

    # Fused, lane-padded head weight/bias: [mean head | log_std head].
    wh = (jnp.zeros((256, 2 * head_pad), jnp.float32)
          .at[:, :action_dim].set(wm)
          .at[:, head_pad:head_pad + action_dim].set(ws))
    bh = (jnp.zeros((1, 2 * head_pad), jnp.float32)
          .at[:, :action_dim].set(bm_)
          .at[:, head_pad:head_pad + action_dim].set(bs_))

    # Weights in bf16 (halves the dominant HBM transfer); biases stay f32.
    return {
        "w1": w1.astype(jnp.bfloat16), "b1": b1,
        "w2": w2.astype(jnp.bfloat16), "b2": b2,
        "wh": wh.astype(jnp.bfloat16), "bh": bh,
    }


# ----------------------------------------------------------------------------
# Pure-JAX reference (same bf16 weights, f32 math) for the correctness check
# ----------------------------------------------------------------------------
def _reference_forward(params, state, log_std_min, log_std_max, action_dim):
    head_pad = params["wh"].shape[1] // 2
    w1 = params["w1"].astype(jnp.float32)
    w2 = params["w2"].astype(jnp.float32)
    wh = params["wh"].astype(jnp.float32)
    wm = wh[:, :action_dim]
    ws = wh[:, head_pad:head_pad + action_dim]
    bmh = params["bh"][:, :action_dim]
    bs = params["bh"][:, head_pad:head_pad + action_dim]
    h = jnp.maximum(state @ w1 + params["b1"], 0.0)
    h = jnp.maximum(h @ w2 + params["b2"], 0.0)
    mean = h @ wm + bmh
    log_std = jnp.clip(h @ ws + bs, log_std_min, log_std_max)
    return mean, log_std


# TODO(synk): full_pass / select_*_action (Normal sampling, tanh rescale_fn,
# exploration ratio, alpha Adam optimizer) are host-side RL plumbing outside
# forward(); not ported. Cross-call weight prefetch (P10) would further
# amortize the ~1.4 MiB weight DMA for small-batch inference loops.
if __name__ == "__main__":
    B, ACTION_DIM = 2, 4
    LOG_STD_MIN, LOG_STD_MAX = -20.0, 2.0

    params = init_params(0, ACTION_DIM)
    state = jax.random.normal(jax.random.PRNGKey(0), (B, 32 * 32), jnp.float32)

    mean, log_std = dactor_forward(params, state,
                                   log_std_min=LOG_STD_MIN,
                                   log_std_max=LOG_STD_MAX,
                                   action_dim=ACTION_DIM)
    mean, log_std = jax.block_until_ready((mean, log_std))

    assert mean.shape == (B, ACTION_DIM), mean.shape
    assert log_std.shape == (B, ACTION_DIM), log_std.shape

    mean_ref, log_std_ref = _reference_forward(
        params, state, LOG_STD_MIN, LOG_STD_MAX, ACTION_DIM)
    assert jnp.allclose(mean, mean_ref, rtol=5e-2, atol=5e-2), (mean, mean_ref)
    assert jnp.allclose(log_std, log_std_ref, rtol=5e-2, atol=5e-2), (
        log_std, log_std_ref)
    assert bool(jnp.all(log_std <= LOG_STD_MAX)) and bool(
        jnp.all(log_std >= LOG_STD_MIN))
    print("KERNEL_OK")
</pallas_src>

<mosaic_0001>
module attributes {stable_mosaic.version = 11 : i64} {
  func.func @_dactor_kernel(%arg0: i32, %arg1: memref<8x1024xf32, #tpu.memory_space<vmem>>, %arg2: memref<1024x512xbf16, #tpu.memory_space<vmem>>, %arg3: memref<1x512xf32, #tpu.memory_space<vmem>>, %arg4: memref<512x256xbf16, #tpu.memory_space<vmem>>, %arg5: memref<1x256xf32, #tpu.memory_space<vmem>>, %arg6: memref<256x256xbf16, #tpu.memory_space<vmem>>, %arg7: memref<1x256xf32, #tpu.memory_space<vmem>>, %arg8: memref<8x256xf32, #tpu.memory_space<vmem>>) attributes {dimension_semantics = [#tpu.dimension_semantics<parallel>], iteration_bounds = array<i64: 1>, scalar_prefetch = 0 : i64, scratch_operands = 0 : i64, tpu.core_type = #tpu.core_type<tc>, window_params = [{transform_indices = @transform_0, window_bounds = array<i64: 8, 1024>}, {pipeline_mode = #tpu.pipeline_mode<synchronous>, transform_indices = @transform_1, window_bounds = array<i64: 1024, 512>}, {pipeline_mode = #tpu.pipeline_mode<synchronous>, transform_indices = @transform_2, window_bounds = array<i64: 1, 512>}, {pipeline_mode = #tpu.pipeline_mode<synchronous>, transform_indices = @transform_3, window_bounds = array<i64: 512, 256>}, {pipeline_mode = #tpu.pipeline_mode<synchronous>, transform_indices = @transform_4, window_bounds = array<i64: 1, 256>}, {pipeline_mode = #tpu.pipeline_mode<synchronous>, transform_indices = @transform_5, window_bounds = array<i64: 256, 256>}, {pipeline_mode = #tpu.pipeline_mode<synchronous>, transform_indices = @transform_6, window_bounds = array<i64: 1, 256>}, {transform_indices = @transform_7, window_bounds = array<i64: 8, 256>}]} {
    %c0 = arith.constant 0 : index
    %c0_0 = arith.constant 0 : index
    %0 = vector.load %arg1[%c0, %c0_0] : memref<8x1024xf32, #tpu.memory_space<vmem>>, vector<8x1024xf32>
    %c0_1 = arith.constant 0 : index
    %c0_2 = arith.constant 0 : index
    %1 = vector.load %arg2[%c0_1, %c0_2] : memref<1024x512xbf16, #tpu.memory_space<vmem>>, vector<1024x512xbf16>
    %cst = arith.constant dense<0.000000e+00> : vector<8x512xf32>
    %2 = tpu.matmul %0, %1, %cst {dimension_numbers = #tpu.dot_dimension_numbers<[1], [0], [0], [1], [0, 0, 1, 1], [], []>} : vector<8x1024xf32>, vector<1024x512xbf16>, vector<8x512xf32> -> vector<8x512xf32>
    %c0_3 = arith.constant 0 : index
    %c0_4 = arith.constant 0 : index
    %3 = vector.load %arg3[%c0_3, %c0_4] : memref<1x512xf32, #tpu.memory_space<vmem>>, vector<1x512xf32>
    %4 = vector.broadcast %3 : vector<1x512xf32> to vector<8x512xf32>
    %5 = arith.addf %2, %4 : vector<8x512xf32>
    %cst_5 = arith.constant 0.000000e+00 : f32
    %6 = vector.broadcast %cst_5 : f32 to vector<8x512xf32>
    %7 = arith.maximumf %5, %6 : vector<8x512xf32>
    %8 = arith.truncf %7 : vector<8x512xf32> to vector<8x512xbf16>
    %c0_6 = arith.constant 0 : index
    %c0_7 = arith.constant 0 : index
    %9 = vector.load %arg4[%c0_6, %c0_7] : memref<512x256xbf16, #tpu.memory_space<vmem>>, vector<512x256xbf16>
    %cst_8 = arith.constant dense<0.000000e+00> : vector<8x256xf32>
    %10 = tpu.matmul %8, %9, %cst_8 {dimension_numbers = #tpu.dot_dimension_numbers<[1], [0], [0], [1], [0, 0, 1, 1], [], []>} : vector<8x512xbf16>, vector<512x256xbf16>, vector<8x256xf32> -> vector<8x256xf32>
    %c0_9 = arith.constant 0 : index
    %c0_10 = arith.constant 0 : index
    %11 = vector.load %arg5[%c0_9, %c0_10] : memref<1x256xf32, #tpu.memory_space<vmem>>, vector<1x256xf32>
    %12 = vector.broadcast %11 : vector<1x256xf32> to vector<8x256xf32>
    %13 = arith.addf %10, %12 : vector<8x256xf32>
    %cst_11 = arith.constant 0.000000e+00 : f32
    %14 = vector.broadcast %cst_11 : f32 to vector<8x256xf32>
    %15 = arith.maximumf %13, %14 : vector<8x256xf32>
    %16 = arith.truncf %15 : vector<8x256xf32> to vector<8x256xbf16>
    %c0_12 = arith.constant 0 : index
    %c0_13 = arith.constant 0 : index
    %17 = vector.load %arg6[%c0_12, %c0_13] : memref<256x256xbf16, #tpu.memory_space<vmem>>, vector<256x256xbf16>
    %cst_14 = arith.constant dense<0.000000e+00> : vector<8x256xf32>
    %18 = tpu.matmul %16, %17, %cst_14 {dimension_numbers = #tpu.dot_dimension_numbers<[1], [0], [0], [1], [0, 0, 1, 1], [], []>} : vector<8x256xbf16>, vector<256x256xbf16>, vector<8x256xf32> -> vector<8x256xf32>
    %c0_15 = arith.constant 0 : index
    %c0_16 = arith.constant 0 : index
    %19 = vector.load %arg7[%c0_15, %c0_16] : memref<1x256xf32, #tpu.memory_space<vmem>>, vector<1x256xf32>
    %20 = vector.broadcast %19 : vector<1x256xf32> to vector<8x256xf32>
    %21 = arith.addf %18, %20 : vector<8x256xf32>
    %22 = vector.extract_strided_slice %21 {offsets = [0, 0], sizes = [8, 128], strides = [1, 1]} : vector<8x256xf32> to vector<8x128xf32>
    %c0_17 = arith.constant 0 : index
    %c0_18 = arith.constant 0 : index
    %23 = vector.load %arg8[%c0_17, %c0_18] : memref<8x256xf32, #tpu.memory_space<vmem>>, vector<8x128xf32>
    tpu.vector_store %arg8[%c0_17, %c0_18], %22 {strides = array<i32>} : memref<8x256xf32, #tpu.memory_space<vmem>>, vector<8x128xf32>,
    %24 = vector.extract_strided_slice %21 {offsets = [0, 128], sizes = [8, 128], strides = [1, 1]} : vector<8x256xf32> to vector<8x128xf32>
    %cst_19 = arith.constant -2.000000e+01 : f32
    %cst_20 = arith.constant 2.000000e+00 : f32
    %25 = vector.broadcast %cst_19 : f32 to vector<8x128xf32>
    %26 = arith.maximumf %25, %24 : vector<8x128xf32>
    %27 = vector.broadcast %cst_20 : f32 to vector<8x128xf32>
    %28 = arith.minimumf %27, %26 : vector<8x128xf32>
    %c0_21 = arith.constant 0 : index
    %c128 = arith.constant 128 : index
    %29 = vector.load %arg8[%c0_21, %c128] : memref<8x256xf32, #tpu.memory_space<vmem>>, vector<8x128xf32>
    tpu.vector_store %arg8[%c0_21, %c128], %28 {strides = array<i32>} : memref<8x256xf32, #tpu.memory_space<vmem>>, vector<8x128xf32>,
    return
  }
  func.func @transform_0(%arg0: i32) -> (i32, i32) {
    %c0_i32 = arith.constant 0 : i32
    %c0_i32_0 = arith.constant 0 : i32
    return %arg0, %c0_i32 : i32, i32
  }
  func.func @transform_1(%arg0: i32) -> (i32, i32) {
    %c0_i32 = arith.constant 0 : i32
    %c0_i32_0 = arith.constant 0 : i32
    %c0_i32_1 = arith.constant 0 : i32
    return %c0_i32, %c0_i32_0 : i32, i32
  }
  func.func @transform_2(%arg0: i32) -> (i32, i32) {
    %c0_i32 = arith.constant 0 : i32
    %c0_i32_0 = arith.constant 0 : i32
    %c0_i32_1 = arith.constant 0 : i32
    return %c0_i32, %c0_i32_0 : i32, i32
  }
  func.func @transform_3(%arg0: i32) -> (i32, i32) {
    %c0_i32 = arith.constant 0 : i32
    %c0_i32_0 = arith.constant 0 : i32
    %c0_i32_1 = arith.constant 0 : i32
    return %c0_i32, %c0_i32_0 : i32, i32
  }
  func.func @transform_4(%arg0: i32) -> (i32, i32) {
    %c0_i32 = arith.constant 0 : i32
    %c0_i32_0 = arith.constant 0 : i32
    %c0_i32_1 = arith.constant 0 : i32
    return %c0_i32, %c0_i32_0 : i32, i32
  }
  func.func @transform_5(%arg0: i32) -> (i32, i32) {
    %c0_i32 = arith.constant 0 : i32
    %c0_i32_0 = arith.constant 0 : i32
    %c0_i32_1 = arith.constant 0 : i32
    return %c0_i32, %c0_i32_0 : i32, i32
  }
  func.func @transform_6(%arg0: i32) -> (i32, i32) {
    %c0_i32 = arith.constant 0 : i32
    %c0_i32_0 = arith.constant 0 : i32
    %c0_i32_1 = arith.constant 0 : i32
    return %c0_i32, %c0_i32_0 : i32, i32
  }
  func.func @transform_7(%arg0: i32) -> (i32, i32) {
    %c0_i32 = arith.constant 0 : i32
    %c0_i32_0 = arith.constant 0 : i32
    return %arg0, %c0_i32 : i32, i32
  }
}

</mosaic_0001>

<llo_original>
// kernel: tpu_custom_call.1
$region0: #{tpu_custom_call.1}
  #allocation0 [shape = 'u32[]', space=smem, size = 0x4, offset = 0x4, fixed_abs, tag = 'smem constant byte address 0x4 - core index']
  #allocation1 [shape = 'u32[144,128]{1,0:T(1,128)}', space=vmem, size = 0x12000, scoped, tag = 'internal scratch']
  %s0 = inlined_call_operand.hbm [shape: f32[8,1024], index: 0, kind: input, shape index: {}]
  %s1 = inlined_call_operand.hbm [shape: bf16[1024,512], index: 1, kind: input, shape index: {}]
  %s2 = inlined_call_operand.vmem [shape: f32[1,512], index: 2, kind: input, shape index: {}]
  %s3 = inlined_call_operand.hbm [shape: bf16[512,256], index: 3, kind: input, shape index: {}]
  %s4 = inlined_call_operand.vmem [shape: f32[1,256], index: 4, kind: input, shape index: {}]
  %s5 = inlined_call_operand.hbm [shape: bf16[256,256], index: 5, kind: input, shape index: {}]
  %s6 = inlined_call_operand.vmem [shape: f32[1,256], index: 6, kind: input, shape index: {}]
  %s7 = inlined_call_operand.hbm [shape: f32[8,256], index: 7, kind: output, shape index: {}]
  %s8 = sld [smem:[#allocation0]]
  $region54: #{tpu_custom_call.1} parent=0
    _
  %s10 = ssub.s32 1, %s8
  %s11 = scalar_select 0, %s10, %s8
  $region1: #{tpu_custom_call.1} parent=0
    #allocation2 [shape = 'u8[32768]{0}', space=vmem, size = 0x8000, scoped, tag = 'input window, operand 0, single buffered']
    #allocation3 [shape = 's32[1]{0}', space=sflag, size = 0x4, scoped, tag = 'scoped memory for tpu_custom_call.1']
    #allocation4 [shape = 's32[1]{0}', space=sflag, size = 0x4, scoped, tag = 'scoped memory for tpu_custom_call.1']
    #allocation5 [shape = 'u8[1048576]{0}', space=vmem, size = 0x100000, scoped, tag = 'input window, operand 1, single buffered']
    #allocation6 [shape = 's32[1]{0}', space=sflag, size = 0x4, scoped, tag = 'scoped memory for tpu_custom_call.1']
    #allocation7 [shape = 'u8[262144]{0}', space=vmem, size = 0x40000, scoped, tag = 'input window, operand 3, single buffered']
    #allocation8 [shape = 'u8[131072]{0}', space=vmem, size = 0x20000, scoped, tag = 'input window, operand 5, single buffered']
    #allocation9 [shape = 's32[1]{0}', space=sflag, size = 0x4, scoped, tag = 'scoped memory for tpu_custom_call.1']
    #allocation10 [shape = 'u8[8192]{0}', space=vmem, size = 0x2000, scoped, tag = 'output window, operand 0, single buffered']
    %12 = vsyncpa [#allocation3], 0
    %13 = vsyncpa [#allocation6], 0
    %14 = vsyncpa [#allocation9], 0
    %15 = vsyncpa [#allocation4], 0
    // Predicated region
    $region2: #{tpu_custom_call.1} parent=1 // pred_check
      _
    $region3: #{tpu_custom_call.1} parent=1 // pred_check_branch
      %17 = sbr.rel (0) target = $region5
    $region4: #{tpu_custom_call.1} parent=1 // pred_region
      %s19 = ssub.s32 1024, 1024
      %20 = vsyncadd [#allocation3], %s19
      %s22 = sshll.u32 [#allocation2], 4
      %s23 = int_to_ptr.vmem [resolvable:$true] %s22
      %25 = dma.hbm_to_vmem [thread:$0]  %s0, 1024, %s23, [#allocation3]
    $region5: #{tpu_custom_call.1} parent=1 // pred_fallthru
      _
    // Predicated region
    $region6: #{tpu_custom_call.1} parent=1 // pred_check
      _
    $region7: #{tpu_custom_call.1} parent=1 // pred_check_branch
      %27 = sbr.rel (0) target = $region9
    $region8: #{tpu_custom_call.1} parent=1 // pred_region
      %s29 = ssub.s32 32768, 32768
      %30 = vsyncadd [#allocation6], %s29
      %s31 = sshll.u32 [#allocation5], 4
      %s32 = int_to_ptr.vmem [resolvable:$true] %s31
      %37 = dma.hbm_to_vmem [thread:$0]  %s1, 32768, %s32, [#allocation6], 256, 256, 16
    $region9: #{tpu_custom_call.1} parent=1 // pred_fallthru
      _
    // Predicated region
    $region10: #{tpu_custom_call.1} parent=1 // pred_check
      _
    $region11: #{tpu_custom_call.1} parent=1 // pred_check_branch
      %39 = sbr.rel (0) target = $region13
    $region12: #{tpu_custom_call.1} parent=1 // pred_region
      _
    $region13: #{tpu_custom_call.1} parent=1 // pred_fallthru
      _
    // Predicated region
    $region14: #{tpu_custom_call.1} parent=1 // pred_check
      _
    $region15: #{tpu_custom_call.1} parent=1 // pred_check_branch
      %41 = sbr.rel (0) target = $region17
    $region16: #{tpu_custom_call.1} parent=1 // pred_region
      %s43 = ssub.s32 8192, 8192
      %44 = vsyncadd [#allocation6], %s43
      %s45 = sshll.u32 [#allocation7], 4
      %s46 = int_to_ptr.vmem [resolvable:$true] %s45
      %51 = dma.hbm_to_vmem [thread:$0]  %s3, 8192, %s46, [#allocation6], 128, 128, 8
    $region17: #{tpu_custom_call.1} parent=1 // pred_fallthru
      _
    // Predicated region
    $region18: #{tpu_custom_call.1} parent=1 // pred_check
      _
    $region19: #{tpu_custom_call.1} parent=1 // pred_check_branch
      %53 = sbr.rel (0) target = $region21
    $region20: #{tpu_custom_call.1} parent=1 // pred_region
      _
    $region21: #{tpu_custom_call.1} parent=1 // pred_fallthru
      _
    // Predicated region
    $region22: #{tpu_custom_call.1} parent=1 // pred_check
      _
    $region23: #{tpu_custom_call.1} parent=1 // pred_check_branch
      %55 = sbr.rel (0) target = $region25
    $region24: #{tpu_custom_call.1} parent=1 // pred_region
      %s57 = ssub.s32 4096, 4096
      %58 = vsyncadd [#allocation9], %s57
      %s59 = sshll.u32 [#allocation8], 4
      %s60 = int_to_ptr.vmem [resolvable:$true] %s59
      %65 = dma.hbm_to_vmem [thread:$0]  %s5, 4096, %s60, [#allocation9], 128, 128, 8
    $region25: #{tpu_custom_call.1} parent=1 // pred_fallthru
      _
    // Predicated region
    $region26: #{tpu_custom_call.1} parent=1 // pred_check
      _
    $region27: #{tpu_custom_call.1} parent=1 // pred_check_branch
      %67 = sbr.rel (0) target = $region29
    $region28: #{tpu_custom_call.1} parent=1 // pred_region
      _
    $region29: #{tpu_custom_call.1} parent=1 // pred_fallthru
      _
    // Predicated region
    $region30: #{tpu_custom_call.1} parent=1 // pred_check
      _
    $region31: #{tpu_custom_call.1} parent=1 // pred_check_branch
      %69 = sbr.rel (0) target = $region33
    $region32: #{tpu_custom_call.1} parent=1 // pred_region
      %70 = dma.done [#allocation3], 1024
    $region33: #{tpu_custom_call.1} parent=1 // pred_fallthru
      _
    // Predicated region
    $region34: #{tpu_custom_call.1} parent=1 // pred_check
      _
    $region35: #{tpu_custom_call.1} parent=1 // pred_check_branch
      %72 = sbr.rel (0) target = $region37
    $region36: #{tpu_custom_call.1} parent=1 // pred_region
      %73 = dma.done [#allocation6], 32768
    $region37: #{tpu_custom_call.1} parent=1 // pred_fallthru
      _
    // Predicated region
    $region38: #{tpu_custom_call.1} parent=1 // pred_check
      _
    $region39: #{tpu_custom_call.1} parent=1 // pred_check_branch
      %75 = sbr.rel (0) target = $region41
    $region40: #{tpu_custom_call.1} parent=1 // pred_region
      %76 = dma.done [#allocation6], 8192
    $region41: #{tpu_custom_call.1} parent=1 // pred_fallthru
      _
    // Predicated region
    $region42: #{tpu_custom_call.1} parent=1 // pred_check
      _
    $region43: #{tpu_custom_call.1} parent=1 // pred_check_branch
      %78 = sbr.rel (0) target = $region45
    $region44: #{tpu_custom_call.1} parent=1 // pred_region
      %79 = dma.done [#allocation9], 4096
    $region45: #{tpu_custom_call.1} parent=1 // pred_fallthru
      _
    %v80 = vld [vmem:[#allocation2] sm:$0xff]
    %v81 = vld [vmem:[#allocation2 + $0x8] sm:$0xff]
    %v82 = vld [vmem:[#allocation2 + $0x10] sm:$0xff]
    %v83 = vld [vmem:[#allocation2 + $0x18] sm:$0xff]
    %v84 = vld [vmem:[#allocation2 + $0x20] sm:$0xff]
    %v85 = vld [vmem:[#allocation2 + $0x28] sm:$0xff]
    %v86 = vld [vmem:[#allocation2 + $0x30] sm:$0xff]
    %v87 = vld [vmem:[#allocation2 + $0x38] sm:$0xff]
    %v88 = vld [vmem:[#allocation5] sm:$0xff]
    %v89 = vld [vmem:[#allocation5 + $0x8] sm:$0xff]
    %v90 = vld [vmem:[#allocation5 + $0x10] sm:$0xff]
    %v91 = vld [vmem:[#allocation5 + $0x18] sm:$0xff]
    %v92 = vld [vmem:[#allocation5 + $0x20] sm:$0xff]
    %v93 = vld [vmem:[#allocation5 + $0x28] sm:$0xff]
    %v94 = vld [vmem:[#allocation5 + $0x30] sm:$0xff]
    %v95 = vld [vmem:[#allocation5 + $0x38] sm:$0xff]
    %v96 = vld [vmem:[#allocation5 + $0x40] sm:$0xff]
    %v97 = vld [vmem:[#allocation5 + $0x48] sm:$0xff]
    %v98 = vld [vmem:[#allocation5 + $0x50] sm:$0xff]
    %v99 = vld [vmem:[#allocation5 + $0x58] sm:$0xff]
    %v100 = vld [vmem:[#allocation5 + $0x60] sm:$0xff]
    %v101 = vld [vmem:[#allocation5 + $0x68] sm:$0xff]
    %v102 = vld [vmem:[#allocation5 + $0x70] sm:$0xff]
    %v103 = vld [vmem:[#allocation5 + $0x78] sm:$0xff]
    %v104 = vld [vmem:[#allocation5 + $0x80] sm:$0xff]
    %v105 = vld [vmem:[#allocation5 + $0x88] sm:$0xff]
    %v106 = vld [vmem:[#allocation5 + $0x90] sm:$0xff]
    %v107 = vld [vmem:[#allocation5 + $0x98] sm:$0xff]
    %v108 = vld [vmem:[#allocation5 + $0xa0] sm:$0xff]
    %v109 = vld [vmem:[#allocation5 + $0xa8] sm:$0xff]
    %v110 = vld [vmem:[#allocation5 + $0xb0] sm:$0xff]
    %v111 = vld [vmem:[#allocation5 + $0xb8] sm:$0xff]
    %v112 = vld [vmem:[#allocation5 + $0xc0] sm:$0xff]
    %v113 = vld [vmem:[#allocation5 + $0xc8] sm:$0xff]
    %v114 = vld [vmem:[#allocation5 + $0xd0] sm:$0xff]
    %v115 = vld [vmem:[#allocation5 + $0xd8] sm:$0xff]
    %v116 = vld [vmem:[#allocation5 + $0xe0] sm:$0xff]
    %v117 = vld [vmem:[#allocation5 + $0xe8] sm:$0xff]
    %v118 = vld [vmem:[#allocation5 + $0xf0] sm:$0xff]
    %v119 = vld [vmem:[#allocation5 + $0xf8] sm:$0xff]
    %v120 = vld [vmem:[#allocation5 + $0x100] sm:$0xff]
    %v121 = vld [vmem:[#allocation5 + $0x108] sm:$0xff]
    %v122 = vld [vmem:[#allocation5 + $0x110] sm:$0xff]
    %v123 = vld [vmem:[#allocation5 + $0x118] sm:$0xff]
    %v124 = vld [vmem:[#allocation5 + $0x120] sm:$0xff]
    %v125 = vld [vmem:[#allocation5 + $0x128] sm:$0xff]
    %v126 = vld [vmem:[#allocation5 + $0x130] sm:$0xff]
    %v127 = vld [vmem:[#allocation5 + $0x138] sm:$0xff]
    %v128 = vld [vmem:[#allocation5 + $0x140] sm:$0xff]
    %v129 = vld [vmem:[#allocation5 + $0x148] sm:$0xff]
    %v130 = vld [vmem:[#allocation5 + $0x150] sm:$0xff]
    %v131 = vld [vmem:[#allocation5 + $0x158] sm:$0xff]
    %v132 = vld [vmem:[#allocation5 + $0x160] sm:$0xff]
    %v133 = vld [vmem:[#allocation5 + $0x168] sm:$0xff]
    %v134 = vld [vmem:[#allocation5 + $0x170] sm:$0xff]
    %v135 = vld [vmem:[#allocation5 + $0x178] sm:$0xff]
    %v136 = vld [vmem:[#allocation5 + $0x180] sm:$0xff]
    %v137 = vld [vmem:[#allocation5 + $0x188] sm:$0xff]
    %v138 = vld [vmem:[#allocation5 + $0x190] sm:$0xff]
    %v139 = vld [vmem:[#allocation5 + $0x198] sm:$0xff]
    %v140 = vld [vmem:[#allocation5 + $0x1a0] sm:$0xff]
    %v141 = vld [vmem:[#allocation5 + $0x1a8] sm:$0xff]
    %v142 = vld [vmem:[#allocation5 + $0x1b0] sm:$0xff]
    %v143 = vld [vmem:[#allocation5 + $0x1b8] sm:$0xff]
    %v144 = vld [vmem:[#allocation5 + $0x1c0] sm:$0xff]
    %v145 = vld [vmem:[#allocation5 + $0x1c8] sm:$0xff]
    %v146 = vld [vmem:[#allocation5 + $0x1d0] sm:$0xff]
    %v147 = vld [vmem:[#allocation5 + $0x1d8] sm:$0xff]
    %v148 = vld [vmem:[#allocation5 + $0x1e0] sm:$0xff]
    %v149 = vld [vmem:[#allocation5 + $0x1e8] sm:$0xff]
    %v150 = vld [vmem:[#allocation5 + $0x1f0] sm:$0xff]
    %v151 = vld [vmem:[#allocation5 + $0x1f8] sm:$0xff]
    %v152 = vld [vmem:[#allocation5 + $0x200] sm:$0xff]
    %v153 = vld [vmem:[#allocation5 + $0x208] sm:$0xff]
    %v154 = vld [vmem:[#allocation5 + $0x210] sm:$0xff]
    %v155 = vld [vmem:[#allocation5 + $0x218] sm:$0xff]
    %v156 = vld [vmem:[#allocation5 + $0x220] sm:$0xff]
    %v157 = vld [vmem:[#allocation5 + $0x228] sm:$0xff]
    %v158 = vld [vmem:[#allocation5 + $0x230] sm:$0xff]
    %v159 = vld [vmem:[#allocation5 + $0x238] sm:$0xff]
    %v160 = vld [vmem:[#allocation5 + $0x240] sm:$0xff]
    %v161 = vld [vmem:[#allocation5 + $0x248] sm:$0xff]
    %v162 = vld [vmem:[#allocation5 + $0x250] sm:$0xff]
    %v163 = vld [vmem:[#allocation5 + $0x258] sm:$0xff]
    %v164 = vld [vmem:[#allocation5 + $0x260] sm:$0xff]
    %v165 = vld [vmem:[#allocation5 + $0x268] sm:$0xff]
    %v166 = vld [vmem:[#allocation5 + $0x270] sm:$0xff]
    %v167 = vld [vmem:[#allocation5 + $0x278] sm:$0xff]
    %v168 = vld [vmem:[#allocation5 + $0x280] sm:$0xff]
    %v169 = vld [vmem:[#allocation5 + $0x288] sm:$0xff]
    %v170 = vld [vmem:[#allocation5 + $0x290] sm:$0xff]
    %v171 = vld [vmem:[#allocation5 + $0x298] sm:$0xff]
    %v172 = vld [vmem:[#allocation5 + $0x2a0] sm:$0xff]
    %v173 = vld [vmem:[#allocation5 + $0x2a8] sm:$0xff]
    %v174 = vld [vmem:[#allocation5 + $0x2b0] sm:$0xff]
    %v175 = vld [vmem:[#allocation5 + $0x2b8] sm:$0xff]
    %v176 = vld [vmem:[#allocation5 + $0x2c0] sm:$0xff]
    %v177 = vld [vmem:[#allocation5 + $0x2c8] sm:$0xff]
    %v178 = vld [vmem:[#allocation5 + $0x2d0] sm:$0xff]
    %v179 = vld [vmem:[#allocation5 + $0x2d8] sm:$0xff]
    %v180 = vld [vmem:[#allocation5 + $0x2e0] sm:$0xff]
    %v181 = vld [vmem:[#allocation5 + $0x2e8] sm:$0xff]
    %v182 = vld [vmem:[#allocation5 + $0x2f0] sm:$0xff]
    %v183 = vld [vmem:[#allocation5 + $0x2f8] sm:$0xff]
    %v184 = vld [vmem:[#allocation5 + $0x300] sm:$0xff]
    %v185 = vld [vmem:[#allocation5 + $0x308] sm:$0xff]
    %v186 = vld [vmem:[#allocation5 + $0x310] sm:$0xff]
    %v187 = vld [vmem:[#allocation5 + $0x318] sm:$0xff]
    %v188 = vld [vmem:[#allocation5 + $0x320] sm:$0xff]
    %v189 = vld [vmem:[#allocation5 + $0x328] sm:$0xff]
    %v190 = vld [vmem:[#allocation5 + $0x330] sm:$0xff]
    %v191 = vld [vmem:[#allocation5 + $0x338] sm:$0xff]
    %v192 = vld [vmem:[#allocation5 + $0x340] sm:$0xff]
    %v193 = vld [vmem:[#allocation5 + $0x348] sm:$0xff]
    %v194 = vld [vmem:[#allocation5 + $0x350] sm:$0xff]
    %v195 = vld [vmem:[#allocation5 + $0x358] sm:$0xff]
    %v196 = vld [vmem:[#allocation5 + $0x360] sm:$0xff]
    %v197 = vld [vmem:[#allocation5 + $0x368] sm:$0xff]
    %v198 = vld [vmem:[#allocation5 + $0x370] sm:$0xff]
    %v199 = vld [vmem:[#allocation5 + $0x378] sm:$0xff]
    %v200 = vld [vmem:[#allocation5 + $0x380] sm:$0xff]
    %v201 = vld [vmem:[#allocation5 + $0x388] sm:$0xff]
    %v202 = vld [vmem:[#allocation5 + $0x390] sm:$0xff]
    %v203 = vld [vmem:[#allocation5 + $0x398] sm:$0xff]
    %v204 = vld [vmem:[#allocation5 + $0x3a0] sm:$0xff]
    %v205 = vld [vmem:[#allocation5 + $0x3a8] sm:$0xff]
    %v206 = vld [vmem:[#allocation5 + $0x3b0] sm:$0xff]
    %v207 = vld [vmem:[#allocation5 + $0x3b8] sm:$0xff]
    %v208 = vld [vmem:[#allocation5 + $0x3c0] sm:$0xff]
    %v209 = vld [vmem:[#allocation5 + $0x3c8] sm:$0xff]
    %v210 = vld [vmem:[#allocation5 + $0x3d0] sm:$0xff]
    %v211 = vld [vmem:[#allocation5 + $0x3d8] sm:$0xff]
    %v212 = vld [vmem:[#allocation5 + $0x3e0] sm:$0xff]
    %v213 = vld [vmem:[#allocation5 + $0x3e8] sm:$0xff]
    %v214 = vld [vmem:[#allocation5 + $0x3f0] sm:$0xff]
    %v215 = vld [vmem:[#allocation5 + $0x3f8] sm:$0xff]
    %v216 = vld [vmem:[#allocation5 + $0x400] sm:$0xff]
    %v217 = vld [vmem:[#allocation5 + $0x408] sm:$0xff]
    %v218 = vld [vmem:[#allocation5 + $0x410] sm:$0xff]
    %v219 = vld [vmem:[#allocation5 + $0x418] sm:$0xff]
    %v220 = vld [vmem:[#allocation5 + $0x420] sm:$0xff]
    %v221 = vld [vmem:[#allocation5 + $0x428] sm:$0xff]
    %v222 = vld [vmem:[#allocation5 + $0x430] sm:$0xff]
    %v223 = vld [vmem:[#allocation5 + $0x438] sm:$0xff]
    %v224 = vld [vmem:[#allocation5 + $0x440] sm:$0xff]
    %v225 = vld [vmem:[#allocation5 + $0x448] sm:$0xff]
    %v226 = vld [vmem:[#allocation5 + $0x450] sm:$0xff]
    %v227 = vld [vmem:[#allocation5 + $0x458] sm:$0xff]
    %v228 = vld [vmem:[#allocation5 + $0x460] sm:$0xff]
    %v229 = vld [vmem:[#allocation5 + $0x468] sm:$0xff]
    %v230 = vld [vmem:[#allocation5 + $0x470] sm:$0xff]
    %v231 = vld [vmem:[#allocation5 + $0x478] sm:$0xff]
    %v232 = vld [vmem:[#allocation5 + $0x480] sm:$0xff]
    %v233 = vld [vmem:[#allocation5 + $0x488] sm:$0xff]
    %v234 = vld [vmem:[#allocation5 + $0x490] sm:$0xff]
    %v235 = vld [vmem:[#allocation5 + $0x498] sm:$0xff]
    %v236 = vld [vmem:[#allocation5 + $0x4a0] sm:$0xff]
    %v237 = vld [vmem:[#allocation5 + $0x4a8] sm:$0xff]
    %v238 = vld [vmem:[#allocation5 + $0x4b0] sm:$0xff]
    %v239 = vld [vmem:[#allocation5 + $0x4b8] sm:$0xff]
    %v240 = vld [vmem:[#allocation5 + $0x4c0] sm:$0xff]
    %v241 = vld [vmem:[#allocation5 + $0x4c8] sm:$0xff]
    %v242 = vld [vmem:[#allocation5 + $0x4d0] sm:$0xff]
    %v243 = vld [vmem:[#allocation5 + $0x4d8] sm:$0xff]
    %v244 = vld [vmem:[#allocation5 + $0x4e0] sm:$0xff]
    %v245 = vld [vmem:[#allocation5 + $0x4e8] sm:$0xff]
    %v246 = vld [vmem:[#allocation5 + $0x4f0] sm:$0xff]
    %v247 = vld [vmem:[#allocation5 + $0x4f8] sm:$0xff]
    %v248 = vld [vmem:[#allocation5 + $0x500] sm:$0xff]
    %v249 = vld [vmem:[#allocation5 + $0x508] sm:$0xff]
    %v250 = vld [vmem:[#allocation5 + $0x510] sm:$0xff]
    %v251 = vld [vmem:[#allocation5 + $0x518] sm:$0xff]
    %v252 = vld [vmem:[#allocation5 + $0x520] sm:$0xff]
    %v253 = vld [vmem:[#allocation5 + $0x528] sm:$0xff]
    %v254 = vld [vmem:[#allocation5 + $0x530] sm:$0xff]
    %v255 = vld [vmem:[#allocation5 + $0x538] sm:$0xff]
    %v256 = vld [vmem:[#allocation5 + $0x540] sm:$0xff]
    %v257 = vld [vmem:[#allocation5 + $0x548] sm:$0xff]
    %v258 = vld [vmem:[#allocation5 + $0x550] sm:$0xff]
    %v259 = vld [vmem:[#allocation5 + $0x558] sm:$0xff]
    %v260 = vld [vmem:[#allocation5 + $0x560] sm:$0xff]
    %v261 = vld [vmem:[#allocation5 + $0x568] sm:$0xff]
    %v262 = vld [vmem:[#allocation5 + $0x570] sm:$0xff]
    %v263 = vld [vmem:[#allocation5 + $0x578] sm:$0xff]
    %v264 = vld [vmem:[#allocation5 + $0x580] sm:$0xff]
    %v265 = vld [vmem:[#allocation5 + $0x588] sm:$0xff]
    %v266 = vld [vmem:[#allocation5 + $0x590] sm:$0xff]
    %v267 = vld [vmem:[#allocation5 + $0x598] sm:$0xff]
    %v268 = vld [vmem:[#allocation5 + $0x5a0] sm:$0xff]
    %v269 = vld [vmem:[#allocation5 + $0x5a8] sm:$0xff]
    %v270 = vld [vmem:[#allocation5 + $0x5b0] sm:$0xff]
    %v271 = vld [vmem:[#allocation5 + $0x5b8] sm:$0xff]
    %v272 = vld [vmem:[#allocation5 + $0x5c0] sm:$0xff]
    %v273 = vld [vmem:[#allocation5 + $0x5c8] sm:$0xff]
    %v274 = vld [vmem:[#allocation5 + $0x5d0] sm:$0xff]
    %v275 = vld [vmem:[#allocation5 + $0x5d8] sm:$0xff]
    %v276 = vld [vmem:[#allocation5 + $0x5e0] sm:$0xff]
    %v277 = vld [vmem:[#allocation5 + $0x5e8] sm:$0xff]
    %v278 = vld [vmem:[#allocation5 + $0x5f0] sm:$0xff]
    %v279 = vld [vmem:[#allocation5 + $0x5f8] sm:$0xff]
    %v280 = vld [vmem:[#allocation5 + $0x600] sm:$0xff]
    %v281 = vld [vmem:[#allocation5 + $0x608] sm:$0xff]
    %v282 = vld [vmem:[#allocation5 + $0x610] sm:$0xff]
    %v283 = vld [vmem:[#allocation5 + $0x618] sm:$0xff]
    %v284 = vld [vmem:[#allocation5 + $0x620] sm:$0xff]
    %v285 = vld [vmem:[#allocation5 + $0x628] sm:$0xff]
    %v286 = vld [vmem:[#allocation5 + $0x630] sm:$0xff]
    %v287 = vld [vmem:[#allocation5 + $0x638] sm:$0xff]
    %v288 = vld [vmem:[#allocation5 + $0x640] sm:$0xff]
    %v289 = vld [vmem:[#allocation5 + $0x648] sm:$0xff]
    %v290 = vld [vmem:[#allocation5 + $0x650] sm:$0xff]
    %v291 = vld [vmem:[#allocation5 + $0x658] sm:$0xff]
    %v292 = vld [vmem:[#allocation5 + $0x660] sm:$0xff]
    %v293 = vld [vmem:[#allocation5 + $0x668] sm:$0xff]
    %v294 = vld [vmem:[#allocation5 + $0x670] sm:$0xff]
    %v295 = vld [vmem:[#allocation5 + $0x678] sm:$0xff]
    %v296 = vld [vmem:[#allocation5 + $0x680] sm:$0xff]
    %v297 = vld [vmem:[#allocation5 + $0x688] sm:$0xff]
    %v298 = vld [vmem:[#allocation5 + $0x690] sm:$0xff]
    %v299 = vld [vmem:[#allocation5 + $0x698] sm:$0xff]
    %v300 = vld [vmem:[#allocation5 + $0x6a0] sm:$0xff]
    %v301 = vld [vmem:[#allocation5 + $0x6a8] sm:$0xff]
    %v302 = vld [vmem:[#allocation5 + $0x6b0] sm:$0xff]
    %v303 = vld [vmem:[#allocation5 + $0x6b8] sm:$0xff]
    %v304 = vld [vmem:[#allocation5 + $0x6c0] sm:$0xff]
    %v305 = vld [vmem:[#allocation5 + $0x6c8] sm:$0xff]
    %v306 = vld [vmem:[#allocation5 + $0x6d0] sm:$0xff]
    %v307 = vld [vmem:[#allocation5 + $0x6d8] sm:$0xff]
    %v308 = vld [vmem:[#allocation5 + $0x6e0] sm:$0xff]
    %v309 = vld [vmem:[#allocation5 + $0x6e8] sm:$0xff]
    %v310 = vld [vmem:[#allocation5 + $0x6f0] sm:$0xff]
    %v311 = vld [vmem:[#allocation5 + $0x6f8] sm:$0xff]
    %v312 = vld [vmem:[#allocation5 + $0x700] sm:$0xff]
    %v313 = vld [vmem:[#allocation5 + $0x708] sm:$0xff]
    %v314 = vld [vmem:[#allocation5 + $0x710] sm:$0xff]
    %v315 = vld [vmem:[#allocation5 + $0x718] sm:$0xff]
    %v316 = vld [vmem:[#allocation5 + $0x720] sm:$0xff]
    %v317 = vld [vmem:[#allocation5 + $0x728] sm:$0xff]
    %v318 = vld [vmem:[#allocation5 + $0x730] sm:$0xff]
    %v319 = vld [vmem:[#allocation5 + $0x738] sm:$0xff]
    %v320 = vld [vmem:[#allocation5 + $0x740] sm:$0xff]
    %v321 = vld [vmem:[#allocation5 + $0x748] sm:$0xff]
    %v322 = vld [vmem:[#allocation5 + $0x750] sm:$0xff]
    %v323 = vld [vmem:[#allocation5 + $0x758] sm:$0xff]
    %v324 = vld [vmem:[#allocation5 + $0x760] sm:$0xff]
    %v325 = vld [vmem:[#allocation5 + $0x768] sm:$0xff]
    %v326 = vld [vmem:[#allocation5 + $0x770] sm:$0xff]
    %v327 = vld [vmem:[#allocation5 + $0x778] sm:$0xff]
    %v328 = vld [vmem:[#allocation5 + $0x780] sm:$0xff]
    %v329 = vld [vmem:[#allocation5 + $0x788] sm:$0xff]
    %v330 = vld [vmem:[#allocation5 + $0x790] sm:$0xff]
    %v331 = vld [vmem:[#allocation5 + $0x798] sm:$0xff]
    %v332 = vld [vmem:[#allocation5 + $0x7a0] sm:$0xff]
    %v333 = vld [vmem:[#allocation5 + $0x7a8] sm:$0xff]
    %v334 = vld [vmem:[#allocation5 + $0x7b0] sm:$0xff]
    %v335 = vld [vmem:[#allocation5 + $0x7b8] sm:$0xff]
    %v336 = vld [vmem:[#allocation5 + $0x7c0] sm:$0xff]
    %v337 = vld [vmem:[#allocation5 + $0x7c8] sm:$0xff]
    %v338 = vld [vmem:[#allocation5 + $0x7d0] sm:$0xff]
    %v339 = vld [vmem:[#allocation5 + $0x7d8] sm:$0xff]
    %v340 = vld [vmem:[#allocation5 + $0x7e0] sm:$0xff]
    %v341 = vld [vmem:[#allocation5 + $0x7e8] sm:$0xff]
    %v342 = vld [vmem:[#allocation5 + $0x7f0] sm:$0xff]
    %v343 = vld [vmem:[#allocation5 + $0x7f8] sm:$0xff]
    %v344 = vld [vmem:[%s2] sm:$0xf]
    %v346 = vlaneseq
    %v347 = vshrl.u32 %v346, 7
    %v348 = vsub.s32 0, %v347
    %v349 = vrot.slane %v344, %v348
    %v350 = vlaneseq
    %v351 = vshrl.u32 %v350, 7
    %v352 = vsub.s32 1, %v351
    %v353 = vrot.slane %v344, %v352
    %v354 = vlaneseq
    %v355 = vshrl.u32 %v354, 7
    %v356 = vsub.s32 2, %v355
    %v357 = vrot.slane %v344, %v356
    %v358 = vlaneseq
    %v359 = vshrl.u32 %v358, 7
    %v360 = vsub.s32 3, %v359
    %v361 = vrot.slane %v344, %v360
    %v622 = vunpack.c.l.b16 %v88
    %v623 = vunpack.c.h.b16 %v88
    %v624 = vunpack.c.l.b16 %v89
    %v625 = vunpack.c.h.b16 %v89
    %v626 = vunpack.c.l.b16 %v90
    %v627 = vunpack.c.h.b16 %v90
    %v628 = vunpack.c.l.b16 %v91
    %v629 = vunpack.c.h.b16 %v91
    %v630 = vunpack.c.l.b16 %v92
    %v631 = vunpack.c.h.b16 %v92
    %v632 = vunpack.c.l.b16 %v93
    %v633 = vunpack.c.h.b16 %v93
    %v634 = vunpack.c.l.b16 %v94
    %v635 = vunpack.c.h.b16 %v94
    %v636 = vunpack.c.l.b16 %v95
    %v637 = vunpack.c.h.b16 %v95
    %v638 = vunpack.c.l.b16 %v96
    %v639 = vunpack.c.h.b16 %v96
    %v640 = vunpack.c.l.b16 %v97
    %v641 = vunpack.c.h.b16 %v97
    %v642 = vunpack.c.l.b16 %v98
    %v643 = vunpack.c.h.b16 %v98
    %v644 = vunpack.c.l.b16 %v99
    %v645 = vunpack.c.h.b16 %v99
    %v646 = vunpack.c.l.b16 %v100
    %v647 = vunpack.c.h.b16 %v100
    %v648 = vunpack.c.l.b16 %v101
    %v649 = vunpack.c.h.b16 %v101
    %v650 = vunpack.c.l.b16 %v102
    %v651 = vunpack.c.h.b16 %v102
    %v652 = vunpack.c.l.b16 %v103
    %v653 = vunpack.c.h.b16 %v103
    %v654 = vunpack.c.l.b16 %v104
    %v655 = vunpack.c.h.b16 %v104
    %v656 = vunpack.c.l.b16 %v105
    %v657 = vunpack.c.h.b16 %v105
    %v658 = vunpack.c.l.b16 %v106
    %v659 = vunpack.c.h.b16 %v106
    %v660 = vunpack.c.l.b16 %v107
    %v661 = vunpack.c.h.b16 %v107
    %v662 = vunpack.c.l.b16 %v108
    %v663 = vunpack.c.h.b16 %v108
    %v664 = vunpack.c.l.b16 %v109
    %v665 = vunpack.c.h.b16 %v109
    %v666 = vunpack.c.l.b16 %v110
    %v667 = vunpack.c.h.b16 %v110
    %v668 = vunpack.c.l.b16 %v111
    %v669 = vunpack.c.h.b16 %v111
    %v670 = vunpack.c.l.b16 %v112
    %v671 = vunpack.c.h.b16 %v112
    %v672 = vunpack.c.l.b16 %v113
    %v673 = vunpack.c.h.b16 %v113
    %v674 = vunpack.c.l.b16 %v114
    %v675 = vunpack.c.h.b16 %v114
    %v676 = vunpack.c.l.b16 %v115
    %v677 = vunpack.c.h.b16 %v115
    %v678 = vunpack.c.l.b16 %v116
    %v679 = vunpack.c.h.b16 %v116
    %v680 = vunpack.c.l.b16 %v117
    %v681 = vunpack.c.h.b16 %v117
    %v682 = vunpack.c.l.b16 %v118
    %v683 = vunpack.c.h.b16 %v118
    %v684 = vunpack.c.l.b16 %v119
    %v685 = vunpack.c.h.b16 %v119
    %v686 = vunpack.c.l.b16 %v120
    %v687 = vunpack.c.h.b16 %v120
    %v688 = vunpack.c.l.b16 %v121
    %v689 = vunpack.c.h.b16 %v121
    %v690 = vunpack.c.l.b16 %v122
    %v691 = vunpack.c.h.b16 %v122
    %v692 = vunpack.c.l.b16 %v123
    %v693 = vunpack.c.h.b16 %v123
    %v694 = vunpack.c.l.b16 %v124
    %v695 = vunpack.c.h.b16 %v124
    %v696 = vunpack.c.l.b16 %v125
    %v697 = vunpack.c.h.b16 %v125
    %v698 = vunpack.c.l.b16 %v126
    %v699 = vunpack.c.h.b16 %v126
    %v700 = vunpack.c.l.b16 %v127
    %v701 = vunpack.c.h.b16 %v127
    %v702 = vunpack.c.l.b16 %v128
    %v703 = vunpack.c.h.b16 %v128
    %v704 = vunpack.c.l.b16 %v129
    %v705 = vunpack.c.h.b16 %v129
    %v706 = vunpack.c.l.b16 %v130
    %v707 = vunpack.c.h.b16 %v130
    %v708 = vunpack.c.l.b16 %v131
    %v709 = vunpack.c.h.b16 %v131
    %v710 = vunpack.c.l.b16 %v132
    %v711 = vunpack.c.h.b16 %v132
    %v712 = vunpack.c.l.b16 %v133
    %v713 = vunpack.c.h.b16 %v133
    %v714 = vunpack.c.l.b16 %v134
    %v715 = vunpack.c.h.b16 %v134
    %v716 = vunpack.c.l.b16 %v135
    %v717 = vunpack.c.h.b16 %v135
    %v718 = vunpack.c.l.b16 %v136
    %v719 = vunpack.c.h.b16 %v136
    %v720 = vunpack.c.l.b16 %v137
    %v721 = vunpack.c.h.b16 %v137
    %v722 = vunpack.c.l.b16 %v138
    %v723 = vunpack.c.h.b16 %v138
    %v724 = vunpack.c.l.b16 %v139
    %v725 = vunpack.c.h.b16 %v139
    %v726 = vunpack.c.l.b16 %v140
    %v727 = vunpack.c.h.b16 %v140
    %v728 = vunpack.c.l.b16 %v141
    %v729 = vunpack.c.h.b16 %v141
    %v730 = vunpack.c.l.b16 %v142
    %v731 = vunpack.c.h.b16 %v142
    %v732 = vunpack.c.l.b16 %v143
    %v733 = vunpack.c.h.b16 %v143
    %v734 = vunpack.c.l.b16 %v144
    %v735 = vunpack.c.h.b16 %v144
    %v736 = vunpack.c.l.b16 %v145
    %v737 = vunpack.c.h.b16 %v145
    %v738 = vunpack.c.l.b16 %v146
    %v739 = vunpack.c.h.b16 %v146
    %v740 = vunpack.c.l.b16 %v147
    %v741 = vunpack.c.h.b16 %v147
    %v742 = vunpack.c.l.b16 %v148
    %v743 = vunpack.c.h.b16 %v148
    %v744 = vunpack.c.l.b16 %v149
    %v745 = vunpack.c.h.b16 %v149
    %v746 = vunpack.c.l.b16 %v150
    %v747 = vunpack.c.h.b16 %v150
    %v748 = vunpack.c.l.b16 %v151
    %v749 = vunpack.c.h.b16 %v151
    %v750 = vunpack.c.l.b16 %v152
    %v751 = vunpack.c.h.b16 %v152
    %v752 = vunpack.c.l.b16 %v153
    %v753 = vunpack.c.h.b16 %v153
    %v754 = vunpack.c.l.b16 %v154
    %v755 = vunpack.c.h.b16 %v154
    %v756 = vunpack.c.l.b16 %v155
    %v757 = vunpack.c.h.b16 %v155
    %v758 = vunpack.c.l.b16 %v156
    %v759 = vunpack.c.h.b16 %v156
    %v760 = vunpack.c.l.b16 %v157
    %v761 = vunpack.c.h.b16 %v157
    %v762 = vunpack.c.l.b16 %v158
    %v763 = vunpack.c.h.b16 %v158
    %v764 = vunpack.c.l.b16 %v159
    %v765 = vunpack.c.h.b16 %v159
    %v766 = vunpack.c.l.b16 %v160
    %v767 = vunpack.c.h.b16 %v160
    %v768 = vunpack.c.l.b16 %v161
    %v769 = vunpack.c.h.b16 %v161
    %v770 = vunpack.c.l.b16 %v162
    %v771 = vunpack.c.h.b16 %v162
    %v772 = vunpack.c.l.b16 %v163
    %v773 = vunpack.c.h.b16 %v163
    %v774 = vunpack.c.l.b16 %v164
    %v775 = vunpack.c.h.b16 %v164
    %v776 = vunpack.c.l.b16 %v165
    %v777 = vunpack.c.h.b16 %v165
    %v778 = vunpack.c.l.b16 %v166
    %v779 = vunpack.c.h.b16 %v166
    %v780 = vunpack.c.l.b16 %v167
    %v781 = vunpack.c.h.b16 %v167
    %v782 = vunpack.c.l.b16 %v168
    %v783 = vunpack.c.h.b16 %v168
    %v784 = vunpack.c.l.b16 %v169
    %v785 = vunpack.c.h.b16 %v169
    %v786 = vunpack.c.l.b16 %v170
    %v787 = vunpack.c.h.b16 %v170
    %v788 = vunpack.c.l.b16 %v171
    %v789 = vunpack.c.h.b16 %v171
    %v790 = vunpack.c.l.b16 %v172
    %v791 = vunpack.c.h.b16 %v172
    %v792 = vunpack.c.l.b16 %v173
    %v793 = vunpack.c.h.b16 %v173
    %v794 = vunpack.c.l.b16 %v174
    %v795 = vunpack.c.h.b16 %v174
    %v796 = vunpack.c.l.b16 %v175
    %v797 = vunpack.c.h.b16 %v175
    %v798 = vunpack.c.l.b16 %v176
    %v799 = vunpack.c.h.b16 %v176
    %v800 = vunpack.c.l.b16 %v177
    %v801 = vunpack.c.h.b16 %v177
    %v802 = vunpack.c.l.b16 %v178
    %v803 = vunpack.c.h.b16 %v178
    %v804 = vunpack.c.l.b16 %v179
    %v805 = vunpack.c.h.b16 %v179
    %v806 = vunpack.c.l.b16 %v180
    %v807 = vunpack.c.h.b16 %v180
    %v808 = vunpack.c.l.b16 %v181
    %v809 = vunpack.c.h.b16 %v181
    %v810 = vunpack.c.l.b16 %v182
    %v811 = vunpack.c.h.b16 %v182
    %v812 = vunpack.c.l.b16 %v183
    %v813 = vunpack.c.h.b16 %v183
    %v814 = vunpack.c.l.b16 %v184
    %v815 = vunpack.c.h.b16 %v184
    %v816 = vunpack.c.l.b16 %v185
    %v817 = vunpack.c.h.b16 %v185
    %v818 = vunpack.c.l.b16 %v186
    %v819 = vunpack.c.h.b16 %v186
    %v820 = vunpack.c.l.b16 %v187
    %v821 = vunpack.c.h.b16 %v187
    %v822 = vunpack.c.l.b16 %v188
    %v823 = vunpack.c.h.b16 %v188
    %v824 = vunpack.c.l.b16 %v189
    %v825 = vunpack.c.h.b16 %v189
    %v826 = vunpack.c.l.b16 %v190
    %v827 = vunpack.c.h.b16 %v190
    %v828 = vunpack.c.l.b16 %v191
    %v829 = vunpack.c.h.b16 %v191
    %v830 = vunpack.c.l.b16 %v192
    %v831 = vunpack.c.h.b16 %v192
    %v832 = vunpack.c.l.b16 %v193
    %v833 = vunpack.c.h.b16 %v193
    %v834 = vunpack.c.l.b16 %v194
    %v835 = vunpack.c.h.b16 %v194
    %v836 = vunpack.c.l.b16 %v195
    %v837 = vunpack.c.h.b16 %v195
    %v838 = vunpack.c.l.b16 %v196
    %v839 = vunpack.c.h.b16 %v196
    %v840 = vunpack.c.l.b16 %v197
    %v841 = vunpack.c.h.b16 %v197
    %v842 = vunpack.c.l.b16 %v198
    %v843 = vunpack.c.h.b16 %v198
    %v844 = vunpack.c.l.b16 %v199
    %v845 = vunpack.c.h.b16 %v199
    %v846 = vunpack.c.l.b16 %v200
    %v847 = vunpack.c.h.b16 %v200
    %v848 = vunpack.c.l.b16 %v201
    %v849 = vunpack.c.h.b16 %v201
    %v850 = vunpack.c.l.b16 %v202
    %v851 = vunpack.c.h.b16 %v202
    %v852 = vunpack.c.l.b16 %v203
    %v853 = vunpack.c.h.b16 %v203
    %v854 = vunpack.c.l.b16 %v204
    %v855 = vunpack.c.h.b16 %v204
    %v856 = vunpack.c.l.b16 %v205
    %v857 = vunpack.c.h.b16 %v205
    %v858 = vunpack.c.l.b16 %v206
    %v859 = vunpack.c.h.b16 %v206
    %v860 = vunpack.c.l.b16 %v207
    %v861 = vunpack.c.h.b16 %v207
    %v862 = vunpack.c.l.b16 %v208
    %v863 = vunpack.c.h.b16 %v208
    %v864 = vunpack.c.l.b16 %v209
    %v865 = vunpack.c.h.b16 %v209
    %v866 = vunpack.c.l.b16 %v210
    %v867 = vunpack.c.h.b16 %v210
    %v868 = vunpack.c.l.b16 %v211
    %v869 = vunpack.c.h.b16 %v211
    %v870 = vunpack.c.l.b16 %v212
    %v871 = vunpack.c.h.b16 %v212
    %v872 = vunpack.c.l.b16 %v213
    %v873 = vunpack.c.h.b16 %v213
    %v874 = vunpack.c.l.b16 %v214
    %v875 = vunpack.c.h.b16 %v214
    %v876 = vunpack.c.l.b16 %v215
    %v877 = vunpack.c.h.b16 %v215
    %v878 = vunpack.c.l.b16 %v216
    %v879 = vunpack.c.h.b16 %v216
    %v880 = vunpack.c.l.b16 %v217
    %v881 = vunpack.c.h.b16 %v217
    %v882 = vunpack.c.l.b16 %v218
    %v883 = vunpack.c.h.b16 %v218
    %v884 = vunpack.c.l.b16 %v219
    %v885 = vunpack.c.h.b16 %v219
    %v886 = vunpack.c.l.b16 %v220
    %v887 = vunpack.c.h.b16 %v220
    %v888 = vunpack.c.l.b16 %v221
    %v889 = vunpack.c.h.b16 %v221
    %v890 = vunpack.c.l.b16 %v222
    %v891 = vunpack.c.h.b16 %v222
    %v892 = vunpack.c.l.b16 %v223
    %v893 = vunpack.c.h.b16 %v223
    %v894 = vunpack.c.l.b16 %v224
    %v895 = vunpack.c.h.b16 %v224
    %v896 = vunpack.c.l.b16 %v225
    %v897 = vunpack.c.h.b16 %v225
    %v898 = vunpack.c.l.b16 %v226
    %v899 = vunpack.c.h.b16 %v226
    %v900 = vunpack.c.l.b16 %v227
    %v901 = vunpack.c.h.b16 %v227
    %v902 = vunpack.c.l.b16 %v228
    %v903 = vunpack.c.h.b16 %v228
    %v904 = vunpack.c.l.b16 %v229
    %v905 = vunpack.c.h.b16 %v229
    %v906 = vunpack.c.l.b16 %v230
    %v907 = vunpack.c.h.b16 %v230
    %v908 = vunpack.c.l.b16 %v231
    %v909 = vunpack.c.h.b16 %v231
    %v910 = vunpack.c.l.b16 %v232
    %v911 = vunpack.c.h.b16 %v232
    %v912 = vunpack.c.l.b16 %v233
    %v913 = vunpack.c.h.b16 %v233
    %v914 = vunpack.c.l.b16 %v234
    %v915 = vunpack.c.h.b16 %v234
    %v916 = vunpack.c.l.b16 %v235
    %v917 = vunpack.c.h.b16 %v235
    %v918 = vunpack.c.l.b16 %v236
    %v919 = vunpack.c.h.b16 %v236
    %v920 = vunpack.c.l.b16 %v237
    %v921 = vunpack.c.h.b16 %v237
    %v922 = vunpack.c.l.b16 %v238
    %v923 = vunpack.c.h.b16 %v238
    %v924 = vunpack.c.l.b16 %v239
    %v925 = vunpack.c.h.b16 %v239
    %v926 = vunpack.c.l.b16 %v240
    %v927 = vunpack.c.h.b16 %v240
    %v928 = vunpack.c.l.b16 %v241
    %v929 = vunpack.c.h.b16 %v241
    %v930 = vunpack.c.l.b16 %v242
    %v931 = vunpack.c.h.b16 %v242
    %v932 = vunpack.c.l.b16 %v243
    %v933 = vunpack.c.h.b16 %v243
    %v934 = vunpack.c.l.b16 %v244
    %v935 = vunpack.c.h.b16 %v244
    %v936 = vunpack.c.l.b16 %v245
    %v937 = vunpack.c.h.b16 %v245
    %v938 = vunpack.c.l.b16 %v246
    %v939 = vunpack.c.h.b16 %v246
    %v940 = vunpack.c.l.b16 %v247
    %v941 = vunpack.c.h.b16 %v247
    %v942 = vunpack.c.l.b16 %v248
    %v943 = vunpack.c.h.b16 %v248
    %v944 = vunpack.c.l.b16 %v249
    %v945 = vunpack.c.h.b16 %v249
    %v946 = vunpack.c.l.b16 %v250
    %v947 = vunpack.c.h.b16 %v250
    %v948 = vunpack.c.l.b16 %v251
    %v949 = vunpack.c.h.b16 %v251
    %v950 = vunpack.c.l.b16 %v252
    %v951 = vunpack.c.h.b16 %v252
    %v952 = vunpack.c.l.b16 %v253
    %v953 = vunpack.c.h.b16 %v253
    %v954 = vunpack.c.l.b16 %v254
    %v955 = vunpack.c.h.b16 %v254
    %v956 = vunpack.c.l.b16 %v255
    %v957 = vunpack.c.h.b16 %v255
    %v958 = vunpack.c.l.b16 %v256
    %v959 = vunpack.c.h.b16 %v256
    %v960 = vunpack.c.l.b16 %v257
    %v961 = vunpack.c.h.b16 %v257
    %v962 = vunpack.c.l.b16 %v258
    %v963 = vunpack.c.h.b16 %v258
    %v964 = vunpack.c.l.b16 %v259
    %v965 = vunpack.c.h.b16 %v259
    %v966 = vunpack.c.l.b16 %v260
    %v967 = vunpack.c.h.b16 %v260
    %v968 = vunpack.c.l.b16 %v261
    %v969 = vunpack.c.h.b16 %v261
    %v970 = vunpack.c.l.b16 %v262
    %v971 = vunpack.c.h.b16 %v262
    %v972 = vunpack.c.l.b16 %v263
    %v973 = vunpack.c.h.b16 %v263
    %v974 = vunpack.c.l.b16 %v264
    %v975 = vunpack.c.h.b16 %v264
    %v976 = vunpack.c.l.b16 %v265
    %v977 = vunpack.c.h.b16 %v265
    %v978 = vunpack.c.l.b16 %v266
    %v979 = vunpack.c.h.b16 %v266
    %v980 = vunpack.c.l.b16 %v267
    %v981 = vunpack.c.h.b16 %v267
    %v982 = vunpack.c.l.b16 %v268
    %v983 = vunpack.c.h.b16 %v268
    %v984 = vunpack.c.l.b16 %v269
    %v985 = vunpack.c.h.b16 %v269
    %v986 = vunpack.c.l.b16 %v270
    %v987 = vunpack.c.h.b16 %v270
    %v988 = vunpack.c.l.b16 %v271
    %v989 = vunpack.c.h.b16 %v271
    %v990 = vunpack.c.l.b16 %v272
    %v991 = vunpack.c.h.b16 %v272
    %v992 = vunpack.c.l.b16 %v273
    %v993 = vunpack.c.h.b16 %v273
    %v994 = vunpack.c.l.b16 %v274
    %v995 = vunpack.c.h.b16 %v274
    %v996 = vunpack.c.l.b16 %v275
    %v997 = vunpack.c.h.b16 %v275
    %v998 = vunpack.c.l.b16 %v276
    %v999 = vunpack.c.h.b16 %v276
    %v1000 = vunpack.c.l.b16 %v277
    %v1001 = vunpack.c.h.b16 %v277
    %v1002 = vunpack.c.l.b16 %v278
    %v1003 = vunpack.c.h.b16 %v278
    %v1004 = vunpack.c.l.b16 %v279
    %v1005 = vunpack.c.h.b16 %v279
    %v1006 = vunpack.c.l.b16 %v280
    %v1007 = vunpack.c.h.b16 %v280
    %v1008 = vunpack.c.l.b16 %v281
    %v1009 = vunpack.c.h.b16 %v281
    %v1010 = vunpack.c.l.b16 %v282
    %v1011 = vunpack.c.h.b16 %v282
    %v1012 = vunpack.c.l.b16 %v283
    %v1013 = vunpack.c.h.b16 %v283
    %v1014 = vunpack.c.l.b16 %v284
    %v1015 = vunpack.c.h.b16 %v284
    %v1016 = vunpack.c.l.b16 %v285
    %v1017 = vunpack.c.h.b16 %v285
    %v1018 = vunpack.c.l.b16 %v286
    %v1019 = vunpack.c.h.b16 %v286
    %v1020 = vunpack.c.l.b16 %v287
    %v1021 = vunpack.c.h.b16 %v287
    %v1022 = vunpack.c.l.b16 %v288
    %v1023 = vunpack.c.h.b16 %v288
    %v1024 = vunpack.c.l.b16 %v289
    %v1025 = vunpack.c.h.b16 %v289
    %v1026 = vunpack.c.l.b16 %v290
    %v1027 = vunpack.c.h.b16 %v290
    %v1028 = vunpack.c.l.b16 %v291
    %v1029 = vunpack.c.h.b16 %v291
    %v1030 = vunpack.c.l.b16 %v292
    %v1031 = vunpack.c.h.b16 %v292
    %v1032 = vunpack.c.l.b16 %v293
    %v1033 = vunpack.c.h.b16 %v293
    %v1034 = vunpack.c.l.b16 %v294
    %v1035 = vunpack.c.h.b16 %v294
    %v1036 = vunpack.c.l.b16 %v295
    %v1037 = vunpack.c.h.b16 %v295
    %v1038 = vunpack.c.l.b16 %v296
    %v1039 = vunpack.c.h.b16 %v296
    %v1040 = vunpack.c.l.b16 %v297
    %v1041 = vunpack.c.h.b16 %v297
    %v1042 = vunpack.c.l.b16 %v298
    %v1043 = vunpack.c.h.b16 %v298
    %v1044 = vunpack.c.l.b16 %v299
    %v1045 = vunpack.c.h.b16 %v299
    %v1046 = vunpack.c.l.b16 %v300
    %v1047 = vunpack.c.h.b16 %v300
    %v1048 = vunpack.c.l.b16 %v301
    %v1049 = vunpack.c.h.b16 %v301
    %v1050 = vunpack.c.l.b16 %v302
    %v1051 = vunpack.c.h.b16 %v302
    %v1052 = vunpack.c.l.b16 %v303
    %v1053 = vunpack.c.h.b16 %v303
    %v1054 = vunpack.c.l.b16 %v304
    %v1055 = vunpack.c.h.b16 %v304
    %v1056 = vunpack.c.l.b16 %v305
    %v1057 = vunpack.c.h.b16 %v305
    %v1058 = vunpack.c.l.b16 %v306
    %v1059 = vunpack.c.h.b16 %v306
    %v1060 = vunpack.c.l.b16 %v307
    %v1061 = vunpack.c.h.b16 %v307
    %v1062 = vunpack.c.l.b16 %v308
    %v1063 = vunpack.c.h.b16 %v308
    %v1064 = vunpack.c.l.b16 %v309
    %v1065 = vunpack.c.h.b16 %v309
    %v1066 = vunpack.c.l.b16 %v310
    %v1067 = vunpack.c.h.b16 %v310
    %v1068 = vunpack.c.l.b16 %v311
    %v1069 = vunpack.c.h.b16 %v311
    %v1070 = vunpack.c.l.b16 %v312
    %v1071 = vunpack.c.h.b16 %v312
    %v1072 = vunpack.c.l.b16 %v313
    %v1073 = vunpack.c.h.b16 %v313
    %v1074 = vunpack.c.l.b16 %v314
    %v1075 = vunpack.c.h.b16 %v314
    %v1076 = vunpack.c.l.b16 %v315
    %v1077 = vunpack.c.h.b16 %v315
    %v1078 = vunpack.c.l.b16 %v316
    %v1079 = vunpack.c.h.b16 %v316
    %v1080 = vunpack.c.l.b16 %v317
    %v1081 = vunpack.c.h.b16 %v317
    %v1082 = vunpack.c.l.b16 %v318
    %v1083 = vunpack.c.h.b16 %v318
    %v1084 = vunpack.c.l.b16 %v319
    %v1085 = vunpack.c.h.b16 %v319
    %v1086 = vunpack.c.l.b16 %v320
    %v1087 = vunpack.c.h.b16 %v320
    %v1088 = vunpack.c.l.b16 %v321
    %v1089 = vunpack.c.h.b16 %v321
    %v1090 = vunpack.c.l.b16 %v322
    %v1091 = vunpack.c.h.b16 %v322
    %v1092 = vunpack.c.l.b16 %v323
    %v1093 = vunpack.c.h.b16 %v323
    %v1094 = vunpack.c.l.b16 %v324
    %v1095 = vunpack.c.h.b16 %v324
    %v1096 = vunpack.c.l.b16 %v325
    %v1097 = vunpack.c.h.b16 %v325
    %v1098 = vunpack.c.l.b16 %v326
    %v1099 = vunpack.c.h.b16 %v326
    %v1100 = vunpack.c.l.b16 %v327
    %v1101 = vunpack.c.h.b16 %v327
    %v1102 = vunpack.c.l.b16 %v328
    %v1103 = vunpack.c.h.b16 %v328
    %v1104 = vunpack.c.l.b16 %v329
    %v1105 = vunpack.c.h.b16 %v329
    %v1106 = vunpack.c.l.b16 %v330
    %v1107 = vunpack.c.h.b16 %v330
    %v1108 = vunpack.c.l.b16 %v331
    %v1109 = vunpack.c.h.b16 %v331
    %v1110 = vunpack.c.l.b16 %v332
    %v1111 = vunpack.c.h.b16 %v332
    %v1112 = vunpack.c.l.b16 %v333
    %v1113 = vunpack.c.h.b16 %v333
    %v1114 = vunpack.c.l.b16 %v334
    %v1115 = vunpack.c.h.b16 %v334
    %v1116 = vunpack.c.l.b16 %v335
    %v1117 = vunpack.c.h.b16 %v335
    %v1118 = vunpack.c.l.b16 %v336
    %v1119 = vunpack.c.h.b16 %v336
    %v1120 = vunpack.c.l.b16 %v337
    %v1121 = vunpack.c.h.b16 %v337
    %v1122 = vunpack.c.l.b16 %v338
    %v1123 = vunpack.c.h.b16 %v338
    %v1124 = vunpack.c.l.b16 %v339
    %v1125 = vunpack.c.h.b16 %v339
    %v1126 = vunpack.c.l.b16 %v340
    %v1127 = vunpack.c.h.b16 %v340
    %v1128 = vunpack.c.l.b16 %v341
    %v1129 = vunpack.c.h.b16 %v341
    %v1130 = vunpack.c.l.b16 %v342
    %v1131 = vunpack.c.h.b16 %v342
    %v1132 = vunpack.c.l.b16 %v343
    %v1133 = vunpack.c.h.b16 %v343
    %v1134 = vpack.c.b16 %v626, %v622
    %v1135 = vpack.c.b16 %v627, %v623
    %v1136 = vpack.c.b16 %v628, %v624
    %v1137 = vpack.c.b16 %v629, %v625
    %v1138 = vpack.c.b16 %v634, %v630
    %v1139 = vpack.c.b16 %v635, %v631
    %v1140 = vpack.c.b16 %v636, %v632
    %v1141 = vpack.c.b16 %v637, %v633
    %v1142 = vpack.c.b16 %v642, %v638
    %v1143 = vpack.c.b16 %v643, %v639
    %v1144 = vpack.c.b16 %v644, %v640
    %v1145 = vpack.c.b16 %v645, %v641
    %v1146 = vpack.c.b16 %v650, %v646
    %v1147 = vpack.c.b16 %v651, %v647
    %v1148 = vpack.c.b16 %v652, %v648
    %v1149 = vpack.c.b16 %v653, %v649
    %v1150 = vpack.c.b16 %v658, %v654
    %v1151 = vpack.c.b16 %v659, %v655
    %v1152 = vpack.c.b16 %v660, %v656
    %v1153 = vpack.c.b16 %v661, %v657
    %v1154 = vpack.c.b16 %v666, %v662
    %v1155 = vpack.c.b16 %v667, %v663
    %v1156 = vpack.c.b16 %v668, %v664
    %v1157 = vpack.c.b16 %v669, %v665
    %v1158 = vpack.c.b16 %v674, %v670
    %v1159 = vpack.c.b16 %v675, %v671
    %v1160 = vpack.c.b16 %v676, %v672
    %v1161 = vpack.c.b16 %v677, %v673
    %v1162 = vpack.c.b16 %v682, %v678
    %v1163 = vpack.c.b16 %v683, %v679
    %v1164 = vpack.c.b16 %v684, %v680
    %v1165 = vpack.c.b16 %v685, %v681
    %v1166 = vpack.c.b16 %v690, %v686
    %v1167 = vpack.c.b16 %v691, %v687
    %v1168 = vpack.c.b16 %v692, %v688
    %v1169 = vpack.c.b16 %v693, %v689
    %v1170 = vpack.c.b16 %v698, %v694
    %v1171 = vpack.c.b16 %v699, %v695
    %v1172 = vpack.c.b16 %v700, %v696
    %v1173 = vpack.c.b16 %v701, %v697
    %v1174 = vpack.c.b16 %v706, %v702
    %v1175 = vpack.c.b16 %v707, %v703
    %v1176 = vpack.c.b16 %v708, %v704
    %v1177 = vpack.c.b16 %v709, %v705
    %v1178 = vpack.c.b16 %v714, %v710
    %v1179 = vpack.c.b16 %v715, %v711
    %v1180 = vpack.c.b16 %v716, %v712
    %v1181 = vpack.c.b16 %v717, %v713
    %v1182 = vpack.c.b16 %v722, %v718
    %v1183 = vpack.c.b16 %v723, %v719
    %v1184 = vpack.c.b16 %v724, %v720
    %v1185 = vpack.c.b16 %v725, %v721
    %v1186 = vpack.c.b16 %v730, %v726
    %v1187 = vpack.c.b16 %v731, %v727
    %v1188 = vpack.c.b16 %v732, %v728
    %v1189 = vpack.c.b16 %v733, %v729
    %v1190 = vpack.c.b16 %v738, %v734
    %v1191 = vpack.c.b16 %v739, %v735
    %v1192 = vpack.c.b16 %v740, %v736
    %v1193 = vpack.c.b16 %v741, %v737
    %v1194 = vpack.c.b16 %v746, %v742
    %v1195 = vpack.c.b16 %v747, %v743
    %v1196 = vpack.c.b16 %v748, %v744
    %v1197 = vpack.c.b16 %v749, %v745
    %v1198 = vpack.c.b16 %v754, %v750
    %v1199 = vpack.c.b16 %v755, %v751
    %v1200 = vpack.c.b16 %v756, %v752
    %v1201 = vpack.c.b16 %v757, %v753
    %v1202 = vpack.c.b16 %v762, %v758
    %v1203 = vpack.c.b16 %v763, %v759
    %v1204 = vpack.c.b16 %v764, %v760
    %v1205 = vpack.c.b16 %v765, %v761
    %v1206 = vpack.c.b16 %v770, %v766
    %v1207 = vpack.c.b16 %v771, %v767
    %v1208 = vpack.c.b16 %v772, %v768
    %v1209 = vpack.c.b16 %v773, %v769
    %v1210 = vpack.c.b16 %v778, %v774
    %v1211 = vpack.c.b16 %v779, %v775
    %v1212 = vpack.c.b16 %v780, %v776
    %v1213 = vpack.c.b16 %v781, %v777
    %v1214 = vpack.c.b16 %v786, %v782
    %v1215 = vpack.c.b16 %v787, %v783
    %v1216 = vpack.c.b16 %v788, %v784
    %v1217 = vpack.c.b16 %v789, %v785
    %v1218 = vpack.c.b16 %v794, %v790
    %v1219 = vpack.c.b16 %v795, %v791
    %v1220 = vpack.c.b16 %v796, %v792
    %v1221 = vpack.c.b16 %v797, %v793
    %v1222 = vpack.c.b16 %v802, %v798
    %v1223 = vpack.c.b16 %v803, %v799
    %v1224 = vpack.c.b16 %v804, %v800
    %v1225 = vpack.c.b16 %v805, %v801
    %v1226 = vpack.c.b16 %v810, %v806
    %v1227 = vpack.c.b16 %v811, %v807
    %v1228 = vpack.c.b16 %v812, %v808
    %v1229 = vpack.c.b16 %v813, %v809
    %v1230 = vpack.c.b16 %v818, %v814
    %v1231 = vpack.c.b16 %v819, %v815
    %v1232 = vpack.c.b16 %v820, %v816
    %v1233 = vpack.c.b16 %v821, %v817
    %v1234 = vpack.c.b16 %v826, %v822
    %v1235 = vpack.c.b16 %v827, %v823
    %v1236 = vpack.c.b16 %v828, %v824
    %v1237 = vpack.c.b16 %v829, %v825
    %v1238 = vpack.c.b16 %v834, %v830
    %v1239 = vpack.c.b16 %v835, %v831
    %v1240 = vpack.c.b16 %v836, %v832
    %v1241 = vpack.c.b16 %v837, %v833
    %v1242 = vpack.c.b16 %v842, %v838
    %v1243 = vpack.c.b16 %v843, %v839
    %v1244 = vpack.c.b16 %v844, %v840
    %v1245 = vpack.c.b16 %v845, %v841
    %v1246 = vpack.c.b16 %v850, %v846
    %v1247 = vpack.c.b16 %v851, %v847
    %v1248 = vpack.c.b16 %v852, %v848
    %v1249 = vpack.c.b16 %v853, %v849
    %v1250 = vpack.c.b16 %v858, %v854
    %v1251 = vpack.c.b16 %v859, %v855
    %v1252 = vpack.c.b16 %v860, %v856
    %v1253 = vpack.c.b16 %v861, %v857
    %v1254 = vpack.c.b16 %v866, %v862
    %v1255 = vpack.c.b16 %v867, %v863
    %v1256 = vpack.c.b16 %v868, %v864
    %v1257 = vpack.c.b16 %v869, %v865
    %v1258 = vpack.c.b16 %v874, %v870
    %v1259 = vpack.c.b16 %v875, %v871
    %v1260 = vpack.c.b16 %v876, %v872
    %v1261 = vpack.c.b16 %v877, %v873
    %v1262 = vpack.c.b16 %v882, %v878
    %v1263 = vpack.c.b16 %v883, %v879
    %v1264 = vpack.c.b16 %v884, %v880
    %v1265 = vpack.c.b16 %v885, %v881
    %v1266 = vpack.c.b16 %v890, %v886
    %v1267 = vpack.c.b16 %v891, %v887
    %v1268 = vpack.c.b16 %v892, %v888
    %v1269 = vpack.c.b16 %v893, %v889
    %v1270 = vpack.c.b16 %v898, %v894
    %v1271 = vpack.c.b16 %v899, %v895
    %v1272 = vpack.c.b16 %v900, %v896
    %v1273 = vpack.c.b16 %v901, %v897
    %v1274 = vpack.c.b16 %v906, %v902
    %v1275 = vpack.c.b16 %v907, %v903
    %v1276 = vpack.c.b16 %v908, %v904
    %v1277 = vpack.c.b16 %v909, %v905
    %v1278 = vpack.c.b16 %v914, %v910
    %v1279 = vpack.c.b16 %v915, %v911
    %v1280 = vpack.c.b16 %v916, %v912
    %v1281 = vpack.c.b16 %v917, %v913
    %v1282 = vpack.c.b16 %v922, %v918
    %v1283 = vpack.c.b16 %v923, %v919
    %v1284 = vpack.c.b16 %v924, %v920
    %v1285 = vpack.c.b16 %v925, %v921
    %v1286 = vpack.c.b16 %v930, %v926
    %v1287 = vpack.c.b16 %v931, %v927
    %v1288 = vpack.c.b16 %v932, %v928
    %v1289 = vpack.c.b16 %v933, %v929
    %v1290 = vpack.c.b16 %v938, %v934
    %v1291 = vpack.c.b16 %v939, %v935
    %v1292 = vpack.c.b16 %v940, %v936
    %v1293 = vpack.c.b16 %v941, %v937
    %v1294 = vpack.c.b16 %v946, %v942
    %v1295 = vpack.c.b16 %v947, %v943
    %v1296 = vpack.c.b16 %v948, %v944
    %v1297 = vpack.c.b16 %v949, %v945
    %v1298 = vpack.c.b16 %v954, %v950
    %v1299 = vpack.c.b16 %v955, %v951
    %v1300 = vpack.c.b16 %v956, %v952
    %v1301 = vpack.c.b16 %v957, %v953
    %v1302 = vpack.c.b16 %v962, %v958
    %v1303 = vpack.c.b16 %v963, %v959
    %v1304 = vpack.c.b16 %v964, %v960
    %v1305 = vpack.c.b16 %v965, %v961
    %v1306 = vpack.c.b16 %v970, %v966
    %v1307 = vpack.c.b16 %v971, %v967
    %v1308 = vpack.c.b16 %v972, %v968
    %v1309 = vpack.c.b16 %v973, %v969
    %v1310 = vpack.c.b16 %v978, %v974
    %v1311 = vpack.c.b16 %v979, %v975
    %v1312 = vpack.c.b16 %v980, %v976
    %v1313 = vpack.c.b16 %v981, %v977
    %v1314 = vpack.c.b16 %v986, %v982
    %v1315 = vpack.c.b16 %v987, %v983
    %v1316 = vpack.c.b16 %v988, %v984
    %v1317 = vpack.c.b16 %v989, %v985
    %v1318 = vpack.c.b16 %v994, %v990
    %v1319 = vpack.c.b16 %v995, %v991
    %v1320 = vpack.c.b16 %v996, %v992
    %v1321 = vpack.c.b16 %v997, %v993
    %v1322 = vpack.c.b16 %v1002, %v998
    %v1323 = vpack.c.b16 %v1003, %v999
    %v1324 = vpack.c.b16 %v1004, %v1000
    %v1325 = vpack.c.b16 %v1005, %v1001
    %v1326 = vpack.c.b16 %v1010, %v1006
    %v1327 = vpack.c.b16 %v1011, %v1007
    %v1328 = vpack.c.b16 %v1012, %v1008
    %v1329 = vpack.c.b16 %v1013, %v1009
    %v1330 = vpack.c.b16 %v1018, %v1014
    %v1331 = vpack.c.b16 %v1019, %v1015
    %v1332 = vpack.c.b16 %v1020, %v1016
    %v1333 = vpack.c.b16 %v1021, %v1017
    %v1334 = vpack.c.b16 %v1026, %v1022
    %v1335 = vpack.c.b16 %v1027, %v1023
    %v1336 = vpack.c.b16 %v1028, %v1024
    %v1337 = vpack.c.b16 %v1029, %v1025
    %v1338 = vpack.c.b16 %v1034, %v1030
    %v1339 = vpack.c.b16 %v1035, %v1031
    %v1340 = vpack.c.b16 %v1036, %v1032
    %v1341 = vpack.c.b16 %v1037, %v1033
    %v1342 = vpack.c.b16 %v1042, %v1038
    %v1343 = vpack.c.b16 %v1043, %v1039
    %v1344 = vpack.c.b16 %v1044, %v1040
    %v1345 = vpack.c.b16 %v1045, %v1041
    %v1346 = vpack.c.b16 %v1050, %v1046
    %v1347 = vpack.c.b16 %v1051, %v1047
    %v1348 = vpack.c.b16 %v1052, %v1048
    %v1349 = vpack.c.b16 %v1053, %v1049
    %v1350 = vpack.c.b16 %v1058, %v1054
    %v1351 = vpack.c.b16 %v1059, %v1055
    %v1352 = vpack.c.b16 %v1060, %v1056
    %v1353 = vpack.c.b16 %v1061, %v1057
    %v1354 = vpack.c.b16 %v1066, %v1062
    %v1355 = vpack.c.b16 %v1067, %v1063
    %v1356 = vpack.c.b16 %v1068, %v1064
    %v1357 = vpack.c.b16 %v1069, %v1065
    %v1358 = vpack.c.b16 %v1074, %v1070
    %v1359 = vpack.c.b16 %v1075, %v1071
    %v1360 = vpack.c.b16 %v1076, %v1072
    %v1361 = vpack.c.b16 %v1077, %v1073
    %v1362 = vpack.c.b16 %v1082, %v1078
    %v1363 = vpack.c.b16 %v1083, %v1079
    %v1364 = vpack.c.b16 %v1084, %v1080
    %v1365 = vpack.c.b16 %v1085, %v1081
    %v1366 = vpack.c.b16 %v1090, %v1086
    %v1367 = vpack.c.b16 %v1091, %v1087
    %v1368 = vpack.c.b16 %v1092, %v1088
    %v1369 = vpack.c.b16 %v1093, %v1089
    %v1370 = vpack.c.b16 %v1098, %v1094
    %v1371 = vpack.c.b16 %v1099, %v1095
    %v1372 = vpack.c.b16 %v1100, %v1096
    %v1373 = vpack.c.b16 %v1101, %v1097
    %v1374 = vpack.c.b16 %v1106, %v1102
    %v1375 = vpack.c.b16 %v1107, %v1103
    %v1376 = vpack.c.b16 %v1108, %v1104
    %v1377 = vpack.c.b16 %v1109, %v1105
    %v1378 = vpack.c.b16 %v1114, %v1110
    %v1379 = vpack.c.b16 %v1115, %v1111
    %v1380 = vpack.c.b16 %v1116, %v1112
    %v1381 = vpack.c.b16 %v1117, %v1113
    %v1382 = vpack.c.b16 %v1122, %v1118
    %v1383 = vpack.c.b16 %v1123, %v1119
    %v1384 = vpack.c.b16 %v1124, %v1120
    %v1385 = vpack.c.b16 %v1125, %v1121
    %v1386 = vpack.c.b16 %v1130, %v1126
    %v1387 = vpack.c.b16 %v1131, %v1127
    %v1388 = vpack.c.b16 %v1132, %v1128
    %v1389 = vpack.c.b16 %v1133, %v1129
    %1646 = vmatprep.subr.bf16.mxu0 %v1135
    %1647 = vmatpush1.bf16.msra.mxu0 %v1134
    %1648 = vmatprep.subr.bf16.mxu0 %v1139
    %1649 = vmatpush1.bf16.msra.mxu0 %v1138
    %1650 = vmatprep.subr.bf16.mxu0 %v1143
    %1651 = vmatpush1.bf16.msra.mxu0 %v1142
    %1652 = vmatprep.subr.bf16.mxu0 %v1147
    %1653 = vmatpush1.bf16.msra.mxu0 %v1146
    %1654 = vmatprep.subr.bf16.mxu0 %v1151
    %1655 = vmatpush1.bf16.msra.mxu0 %v1150
    %1656 = vmatprep.subr.bf16.mxu0 %v1155
    %1657 = vmatpush1.bf16.msra.mxu0 %v1154
    %1658 = vmatprep.subr.bf16.mxu0 %v1159
    %1659 = vmatpush1.bf16.msra.mxu0 %v1158
    %1660 = vmatprep.subr.bf16.mxu0 %v1163
    %1661 = vmatpush1.bf16.msra.mxu0 %v1162
    %1662 = vmatprep.subr.bf16.mxu0 %v1167
    %1663 = vmatpush1.bf16.msra.mxu0 %v1166
    %1664 = vmatprep.subr.bf16.mxu0 %v1171
    %1665 = vmatpush1.bf16.msra.mxu0 %v1170
    %1666 = vmatprep.subr.bf16.mxu0 %v1175
    %1667 = vmatpush1.bf16.msra.mxu0 %v1174
    %1668 = vmatprep.subr.bf16.mxu0 %v1179
    %1669 = vmatpush1.bf16.msra.mxu0 %v1178
    %1670 = vmatprep.subr.bf16.mxu0 %v1183
    %1671 = vmatpush1.bf16.msra.mxu0 %v1182
    %1672 = vmatprep.subr.bf16.mxu0 %v1187
    %1673 = vmatpush1.bf16.msra.mxu0 %v1186
    %1674 = vmatprep.subr.bf16.mxu0 %v1191
    %1675 = vmatpush1.bf16.msra.mxu0 %v1190
    %1676 = vmatprep.subr.bf16.mxu0 %v1195
    %1677 = vmatpush1.bf16.msra.mxu0 %v1194
    %1678 = vmatprep.mubr.f32.mxu0 %v81
    %1679 = vmatmul.mubr.f32.gmra.mrb[0].mxu0 %v80
    %v1680 = vpop.f32.mrb[0].mxu0
    %v1681 = vadd.f32 %v349, %v1680
    %v1682 = vpop.f32.mrb[0].mxu0
    %v1683 = vadd.f32 %v353, %v1682
    %1684 = vdwg.mxu0
    %1685 = vmatprep.subr.bf16.mxu0 %v1199
    %1686 = vmatpush1.bf16.msra.mxu0 %v1198
    %1687 = vmatprep.subr.bf16.mxu0 %v1203
    %1688 = vmatpush1.bf16.msra.mxu0 %v1202
    %1689 = vmatprep.subr.bf16.mxu0 %v1207
    %1690 = vmatpush1.bf16.msra.mxu0 %v1206
    %1691 = vmatprep.subr.bf16.mxu0 %v1211
    %1692 = vmatpush1.bf16.msra.mxu0 %v1210
    %1693 = vmatprep.subr.bf16.mxu0 %v1215
    %1694 = vmatpush1.bf16.msra.mxu0 %v1214
    %1695 = vmatprep.subr.bf16.mxu0 %v1219
    %1696 = vmatpush1.bf16.msra.mxu0 %v1218
    %1697 = vmatprep.subr.bf16.mxu0 %v1223
    %1698 = vmatpush1.bf16.msra.mxu0 %v1222
    %1699 = vmatprep.subr.bf16.mxu0 %v1227
    %1700 = vmatpush1.bf16.msra.mxu0 %v1226
    %1701 = vmatprep.subr.bf16.mxu0 %v1231
    %1702 = vmatpush1.bf16.msra.mxu0 %v1230
    %1703 = vmatprep.subr.bf16.mxu0 %v1235
    %1704 = vmatpush1.bf16.msra.mxu0 %v1234
    %1705 = vmatprep.subr.bf16.mxu0 %v1239
    %1706 = vmatpush1.bf16.msra.mxu0 %v1238
    %1707 = vmatprep.subr.bf16.mxu0 %v1243
    %1708 = vmatpush1.bf16.msra.mxu0 %v1242
    %1709 = vmatprep.subr.bf16.mxu0 %v1247
    %1710 = vmatpush1.bf16.msra.mxu0 %v1246
    %1711 = vmatprep.subr.bf16.mxu0 %v1251
    %1712 = vmatpush1.bf16.msra.mxu0 %v1250
    %1713 = vmatprep.subr.bf16.mxu0 %v1255
    %1714 = vmatpush1.bf16.msra.mxu0 %v1254
    %1715 = vmatprep.subr.bf16.mxu0 %v1259
    %1716 = vmatpush1.bf16.msra.mxu0 %v1258
    %1717 = vmatprep.mubr.f32.mxu0 %v83
    %1718 = vmatmul.mubr.f32.gmra.mrb[0].mxu0 %v82
    %v1719 = vpop.f32.mrb[0].mxu0
    %v1720 = vadd.f32 %v1681, %v1719
    %v1721 = vpop.f32.mrb[0].mxu0
    %v1722 = vadd.f32 %v1683, %v1721
    %1723 = vdwg.mxu0
    %1724 = vmatprep.subr.bf16.mxu0 %v1263
    %1725 = vmatpush1.bf16.msra.mxu0 %v1262
    %1726 = vmatprep.subr.bf16.mxu0 %v1267
    %1727 = vmatpush1.bf16.msra.mxu0 %v1266
    %1728 = vmatprep.subr.bf16.mxu0 %v1271
    %1729 = vmatpush1.bf16.msra.mxu0 %v1270
    %1730 = vmatprep.subr.bf16.mxu0 %v1275
    %1731 = vmatpush1.bf16.msra.mxu0 %v1274
    %1732 = vmatprep.subr.bf16.mxu0 %v1279
    %1733 = vmatpush1.bf16.msra.mxu0 %v1278
    %1734 = vmatprep.subr.bf16.mxu0 %v1283
    %1735 = vmatpush1.bf16.msra.mxu0 %v1282
    %1736 = vmatprep.subr.bf16.mxu0 %v1287
    %1737 = vmatpush1.bf16.msra.mxu0 %v1286
    %1738 = vmatprep.subr.bf16.mxu0 %v1291
    %1739 = vmatpush1.bf16.msra.mxu0 %v1290
    %1740 = vmatprep.subr.bf16.mxu0 %v1295
    %1741 = vmatpush1.bf16.msra.mxu0 %v1294
    %1742 = vmatprep.subr.bf16.mxu0 %v1299
    %1743 = vmatpush1.bf16.msra.mxu0 %v1298
    %1744 = vmatprep.subr.bf16.mxu0 %v1303
    %1745 = vmatpush1.bf16.msra.mxu0 %v1302
    %1746 = vmatprep.subr.bf16.mxu0 %v1307
    %1747 = vmatpush1.bf16.msra.mxu0 %v1306
    %1748 = vmatprep.subr.bf16.mxu0 %v1311
    %1749 = vmatpush1.bf16.msra.mxu0 %v1310
    %1750 = vmatprep.subr.bf16.mxu0 %v1315
    %1751 = vmatpush1.bf16.msra.mxu0 %v1314
    %1752 = vmatprep.subr.bf16.mxu0 %v1319
    %1753 = vmatpush1.bf16.msra.mxu0 %v1318
    %1754 = vmatprep.subr.bf16.mxu0 %v1323
    %1755 = vmatpush1.bf16.msra.mxu0 %v1322
    %1756 = vmatprep.mubr.f32.mxu0 %v85
    %1757 = vmatmul.mubr.f32.gmra.mrb[0].mxu0 %v84
    %v1758 = vpop.f32.mrb[0].mxu0
    %v1759 = vadd.f32 %v1720, %v1758
    %v1760 = vpop.f32.mrb[0].mxu0
    %v1761 = vadd.f32 %v1722, %v1760
    %1762 = vdwg.mxu0
    %1763 = vmatprep.subr.bf16.mxu0 %v1327
    %1764 = vmatpush1.bf16.msra.mxu0 %v1326
    %1765 = vmatprep.subr.bf16.mxu0 %v1331
    %1766 = vmatpush1.bf16.msra.mxu0 %v1330
    %1767 = vmatprep.subr.bf16.mxu0 %v1335
    %1768 = vmatpush1.bf16.msra.mxu0 %v1334
    %1769 = vmatprep.subr.bf16.mxu0 %v1339
    %1770 = vmatpush1.bf16.msra.mxu0 %v1338
    %1771 = vmatprep.subr.bf16.mxu0 %v1343
    %1772 = vmatpush1.bf16.msra.mxu0 %v1342
    %1773 = vmatprep.subr.bf16.mxu0 %v1347
    %1774 = vmatpush1.bf16.msra.mxu0 %v1346
    %1775 = vmatprep.subr.bf16.mxu0 %v1351
    %1776 = vmatpush1.bf16.msra.mxu0 %v1350
    %1777 = vmatprep.subr.bf16.mxu0 %v1355
    %1778 = vmatpush1.bf16.msra.mxu0 %v1354
    %1779 = vmatprep.subr.bf16.mxu0 %v1359
    %1780 = vmatpush1.bf16.msra.mxu0 %v1358
    %1781 = vmatprep.subr.bf16.mxu0 %v1363
    %1782 = vmatpush1.bf16.msra.mxu0 %v1362
    %1783 = vmatprep.subr.bf16.mxu0 %v1367
    %1784 = vmatpush1.bf16.msra.mxu0 %v1366
    %1785 = vmatprep.subr.bf16.mxu0 %v1371
    %1786 = vmatpush1.bf16.msra.mxu0 %v1370
    %1787 = vmatprep.subr.bf16.mxu0 %v1375
    %1788 = vmatpush1.bf16.msra.mxu0 %v1374
    %1789 = vmatprep.subr.bf16.mxu0 %v1379
    %1790 = vmatpush1.bf16.msra.mxu0 %v1378
    %1791 = vmatprep.subr.bf16.mxu0 %v1383
    %1792 = vmatpush1.bf16.msra.mxu0 %v1382
    %1793 = vmatprep.subr.bf16.mxu0 %v1387
    %1794 = vmatpush1.bf16.msra.mxu0 %v1386
    %1795 = vmatprep.mubr.f32.mxu0 %v87
    %1796 = vmatmul.mubr.f32.gmra.mrb[0].mxu0 %v86
    %v1797 = vpop.f32.mrb[0].mxu0
    %v1798 = vadd.f32 %v1759, %v1797
    %v1799 = vpop.f32.mrb[0].mxu0
    %v1800 = vadd.f32 %v1761, %v1799
    %1801 = vdwg.mxu0
    %1802 = vmatprep.subr.bf16.mxu0 %v1137
    %1803 = vmatpush1.bf16.msra.mxu0 %v1136
    %1804 = vmatprep.subr.bf16.mxu0 %v1141
    %1805 = vmatpush1.bf16.msra.mxu0 %v1140
    %1806 = vmatprep.subr.bf16.mxu0 %v1145
    %1807 = vmatpush1.bf16.msra.mxu0 %v1144
    %1808 = vmatprep.subr.bf16.mxu0 %v1149
    %1809 = vmatpush1.bf16.msra.mxu0 %v1148
    %1810 = vmatprep.subr.bf16.mxu0 %v1153
    %1811 = vmatpush1.bf16.msra.mxu0 %v1152
    %1812 = vmatprep.subr.bf16.mxu0 %v1157
    %1813 = vmatpush1.bf16.msra.mxu0 %v1156
    %1814 = vmatprep.subr.bf16.mxu0 %v1161
    %1815 = vmatpush1.bf16.msra.mxu0 %v1160
    %1816 = vmatprep.subr.bf16.mxu0 %v1165
    %1817 = vmatpush1.bf16.msra.mxu0 %v1164
    %1818 = vmatprep.subr.bf16.mxu0 %v1169
    %1819 = vmatpush1.bf16.msra.mxu0 %v1168
    %1820 = vmatprep.subr.bf16.mxu0 %v1173
    %1821 = vmatpush1.bf16.msra.mxu0 %v1172
    %1822 = vmatprep.subr.bf16.mxu0 %v1177
    %1823 = vmatpush1.bf16.msra.mxu0 %v1176
    %1824 = vmatprep.subr.bf16.mxu0 %v1181
    %1825 = vmatpush1.bf16.msra.mxu0 %v1180
    %1826 = vmatprep.subr.bf16.mxu0 %v1185
    %1827 = vmatpush1.bf16.msra.mxu0 %v1184
    %1828 = vmatprep.subr.bf16.mxu0 %v1189
    %1829 = vmatpush1.bf16.msra.mxu0 %v1188
    %1830 = vmatprep.subr.bf16.mxu0 %v1193
    %1831 = vmatpush1.bf16.msra.mxu0 %v1192
    %1832 = vmatprep.subr.bf16.mxu0 %v1197
    %1833 = vmatpush1.bf16.msra.mxu0 %v1196
    %1834 = vmatprep.mubr.f32.mxu0 %v81
    %1835 = vmatmul.mubr.f32.gmra.mrb[0].mxu0 %v80
    %v1836 = vpop.f32.mrb[0].mxu0
    %v1837 = vadd.f32 %v357, %v1836
    %v1838 = vpop.f32.mrb[0].mxu0
    %v1839 = vadd.f32 %v361, %v1838
    %1840 = vdwg.mxu0
    %1841 = vmatprep.subr.bf16.mxu0 %v1201
    %1842 = vmatpush1.bf16.msra.mxu0 %v1200
    %1843 = vmatprep.subr.bf16.mxu0 %v1205
    %1844 = vmatpush1.bf16.msra.mxu0 %v1204
    %1845 = vmatprep.subr.bf16.mxu0 %v1209
    %1846 = vmatpush1.bf16.msra.mxu0 %v1208
    %1847 = vmatprep.subr.bf16.mxu0 %v1213
    %1848 = vmatpush1.bf16.msra.mxu0 %v1212
    %1849 = vmatprep.subr.bf16.mxu0 %v1217
    %1850 = vmatpush1.bf16.msra.mxu0 %v1216
    %1851 = vmatprep.subr.bf16.mxu0 %v1221
    %1852 = vmatpush1.bf16.msra.mxu0 %v1220
    %1853 = vmatprep.subr.bf16.mxu0 %v1225
    %1854 = vmatpush1.bf16.msra.mxu0 %v1224
    %1855 = vmatprep.subr.bf16.mxu0 %v1229
    %1856 = vmatpush1.bf16.msra.mxu0 %v1228
    %1857 = vmatprep.subr.bf16.mxu0 %v1233
    %1858 = vmatpush1.bf16.msra.mxu0 %v1232
    %1859 = vmatprep.subr.bf16.mxu0 %v1237
    %1860 = vmatpush1.bf16.msra.mxu0 %v1236
    %1861 = vmatprep.subr.bf16.mxu0 %v1241
    %1862 = vmatpush1.bf16.msra.mxu0 %v1240
    %1863 = vmatprep.subr.bf16.mxu0 %v1245
    %1864 = vmatpush1.bf16.msra.mxu0 %v1244
    %1865 = vmatprep.subr.bf16.mxu0 %v1249
    %1866 = vmatpush1.bf16.msra.mxu0 %v1248
    %1867 = vmatprep.subr.bf16.mxu0 %v1253
    %1868 = vmatpush1.bf16.msra.mxu0 %v1252
    %1869 = vmatprep.subr.bf16.mxu0 %v1257
    %1870 = vmatpush1.bf16.msra.mxu0 %v1256
    %1871 = vmatprep.subr.bf16.mxu0 %v1261
    %1872 = vmatpush1.bf16.msra.mxu0 %v1260
    %1873 = vmatprep.mubr.f32.mxu0 %v83
    %1874 = vmatmul.mubr.f32.gmra.mrb[0].mxu0 %v82
    %v1875 = vpop.f32.mrb[0].mxu0
    %v1876 = vadd.f32 %v1837, %v1875
    %v1877 = vpop.f32.mrb[0].mxu0
    %v1878 = vadd.f32 %v1839, %v1877
    %1879 = vdwg.mxu0
    %1880 = vmatprep.subr.bf16.mxu0 %v1265
    %1881 = vmatpush1.bf16.msra.mxu0 %v1264
    %1882 = vmatprep.subr.bf16.mxu0 %v1269
    %1883 = vmatpush1.bf16.msra.mxu0 %v1268
    %1884 = vmatprep.subr.bf16.mxu0 %v1273
    %1885 = vmatpush1.bf16.msra.mxu0 %v1272
    %1886 = vmatprep.subr.bf16.mxu0 %v1277
    %1887 = vmatpush1.bf16.msra.mxu0 %v1276
    %1888 = vmatprep.subr.bf16.mxu0 %v1281
    %1889 = vmatpush1.bf16.msra.mxu0 %v1280
    %1890 = vmatprep.subr.bf16.mxu0 %v1285
    %1891 = vmatpush1.bf16.msra.mxu0 %v1284
    %1892 = vmatprep.subr.bf16.mxu0 %v1289
    %1893 = vmatpush1.bf16.msra.mxu0 %v1288
    %1894 = vmatprep.subr.bf16.mxu0 %v1293
    %1895 = vmatpush1.bf16.msra.mxu0 %v1292
    %1896 = vmatprep.subr.bf16.mxu0 %v1297
    %1897 = vmatpush1.bf16.msra.mxu0 %v1296
    %1898 = vmatprep.subr.bf16.mxu0 %v1301
    %1899 = vmatpush1.bf16.msra.mxu0 %v1300
    %1900 = vmatprep.subr.bf16.mxu0 %v1305
    %1901 = vmatpush1.bf16.msra.mxu0 %v1304
    %1902 = vmatprep.subr.bf16.mxu0 %v1309
    %1903 = vmatpush1.bf16.msra.mxu0 %v1308
    %1904 = vmatprep.subr.bf16.mxu0 %v1313
    %1905 = vmatpush1.bf16.msra.mxu0 %v1312
    %1906 = vmatprep.subr.bf16.mxu0 %v1317
    %1907 = vmatpush1.bf16.msra.mxu0 %v1316
    %1908 = vmatprep.subr.bf16.mxu0 %v1321
    %1909 = vmatpush1.bf16.msra.mxu0 %v1320
    %1910 = vmatprep.subr.bf16.mxu0 %v1325
    %1911 = vmatpush1.bf16.msra.mxu0 %v1324
    %1912 = vmatprep.mubr.f32.mxu0 %v85
    %1913 = vmatmul.mubr.f32.gmra.mrb[0].mxu0 %v84
    %v1914 = vpop.f32.mrb[0].mxu0
    %v1915 = vadd.f32 %v1876, %v1914
    %v1916 = vpop.f32.mrb[0].mxu0
    %v1917 = vadd.f32 %v1878, %v1916
    %1918 = vdwg.mxu0
    %1919 = vmatprep.subr.bf16.mxu0 %v1329
    %1920 = vmatpush1.bf16.msra.mxu0 %v1328
    %1921 = vmatprep.subr.bf16.mxu0 %v1333
    %1922 = vmatpush1.bf16.msra.mxu0 %v1332
    %1923 = vmatprep.subr.bf16.mxu0 %v1337
    %1924 = vmatpush1.bf16.msra.mxu0 %v1336
    %1925 = vmatprep.subr.bf16.mxu0 %v1341
    %1926 = vmatpush1.bf16.msra.mxu0 %v1340
    %1927 = vmatprep.subr.bf16.mxu0 %v1345
    %1928 = vmatpush1.bf16.msra.mxu0 %v1344
    %1929 = vmatprep.subr.bf16.mxu0 %v1349
    %1930 = vmatpush1.bf16.msra.mxu0 %v1348
    %1931 = vmatprep.subr.bf16.mxu0 %v1353
    %1932 = vmatpush1.bf16.msra.mxu0 %v1352
    %1933 = vmatprep.subr.bf16.mxu0 %v1357
    %1934 = vmatpush1.bf16.msra.mxu0 %v1356
    %1935 = vmatprep.subr.bf16.mxu0 %v1361
    %1936 = vmatpush1.bf16.msra.mxu0 %v1360
    %1937 = vmatprep.subr.bf16.mxu0 %v1365
    %1938 = vmatpush1.bf16.msra.mxu0 %v1364
    %1939 = vmatprep.subr.bf16.mxu0 %v1369
    %1940 = vmatpush1.bf16.msra.mxu0 %v1368
    %1941 = vmatprep.subr.bf16.mxu0 %v1373
    %1942 = vmatpush1.bf16.msra.mxu0 %v1372
    %1943 = vmatprep.subr.bf16.mxu0 %v1377
    %1944 = vmatpush1.bf16.msra.mxu0 %v1376
    %1945 = vmatprep.subr.bf16.mxu0 %v1381
    %1946 = vmatpush1.bf16.msra.mxu0 %v1380
    %1947 = vmatprep.subr.bf16.mxu0 %v1385
    %1948 = vmatpush1.bf16.msra.mxu0 %v1384
    %1949 = vmatprep.subr.bf16.mxu0 %v1389
    %1950 = vmatpush1.bf16.msra.mxu0 %v1388
    %1951 = vmatprep.mubr.f32.mxu0 %v87
    %1952 = vmatmul.mubr.f32.gmra.mrb[0].mxu0 %v86
    %v1953 = vpop.f32.mrb[0].mxu0
    %v1954 = vadd.f32 %v1915, %v1953
    %v1955 = vpop.f32.mrb[0].mxu0
    %v1956 = vadd.f32 %v1917, %v1955
    %1957 = vdwg.mxu0
    %v1958 = vmax.f32 %v1798, 0.0
    %v1959 = vmax.f32 %v1800, 0.0
    %v1960 = vmax.f32 %v1954, 0.0
    %v1961 = vmax.f32 %v1956, 0.0
    %v1962 = vpack.c.bf16 %v1958, %v1958
    %v1963 = vpack.c.bf16 %v1959, %v1959
    %v1964 = vpack.c.bf16 %v1960, %v1960
    %v1965 = vpack.c.bf16 %v1961, %v1961
    %v1966 = vld [vmem:[#allocation7] sm:$0xff]
    %v1967 = vld [vmem:[#allocation7 + $0x8] sm:$0xff]
    %v1968 = vld [vmem:[#allocation7 + $0x10] sm:$0xff]
    %v1969 = vld [vmem:[#allocation7 + $0x18] sm:$0xff]
    %v1970 = vld [vmem:[#allocation7 + $0x20] sm:$0xff]
    %v1971 = vld [vmem:[#allocation7 + $0x28] sm:$0xff]
    %v1972 = vld [vmem:[#allocation7 + $0x30] sm:$0xff]
    %v1973 = vld [vmem:[#allocation7 + $0x38] sm:$0xff]
    %v1974 = vld [vmem:[#allocation7 + $0x40] sm:$0xff]
    %v1975 = vld [vmem:[#allocation7 + $0x48] sm:$0xff]
    %v1976 = vld [vmem:[#allocation7 + $0x50] sm:$0xff]
    %v1977 = vld [vmem:[#allocation7 + $0x58] sm:$0xff]
    %v1978 = vld [vmem:[#allocation7 + $0x60] sm:$0xff]
    %v1979 = vld [vmem:[#allocation7 + $0x68] sm:$0xff]
    %v1980 = vld [vmem:[#allocation7 + $0x70] sm:$0xff]
    %v1981 = vld [vmem:[#allocation7 + $0x78] sm:$0xff]
    %v1982 = vld [vmem:[#allocation7 + $0x80] sm:$0xff]
    %v1983 = vld [vmem:[#allocation7 + $0x88] sm:$0xff]
    %v1984 = vld [vmem:[#allocation7 + $0x90] sm:$0xff]
    %v1985 = vld [vmem:[#allocation7 + $0x98] sm:$0xff]
    %v1986 = vld [vmem:[#allocation7 + $0xa0] sm:$0xff]
    %v1987 = vld [vmem:[#allocation7 + $0xa8] sm:$0xff]
    %v1988 = vld [vmem:[#allocation7 + $0xb0] sm:$0xff]
    %v1989 = vld [vmem:[#allocation7 + $0xb8] sm:$0xff]
    %v1990 = vld [vmem:[#allocation7 + $0xc0] sm:$0xff]
    %v1991 = vld [vmem:[#allocation7 + $0xc8] sm:$0xff]
    %v1992 = vld [vmem:[#allocation7 + $0xd0] sm:$0xff]
    %v1993 = vld [vmem:[#allocation7 + $0xd8] sm:$0xff]
    %v1994 = vld [vmem:[#allocation7 + $0xe0] sm:$0xff]
    %v1995 = vld [vmem:[#allocation7 + $0xe8] sm:$0xff]
    %v1996 = vld [vmem:[#allocation7 + $0xf0] sm:$0xff]
    %v1997 = vld [vmem:[#allocation7 + $0xf8] sm:$0xff]
    %v1998 = vld [vmem:[#allocation7 + $0x100] sm:$0xff]
    %v1999 = vld [vmem:[#allocation7 + $0x108] sm:$0xff]
    %v2000 = vld [vmem:[#allocation7 + $0x110] sm:$0xff]
    %v2001 = vld [vmem:[#allocation7 + $0x118] sm:$0xff]
    %v2002 = vld [vmem:[#allocation7 + $0x120] sm:$0xff]
    %v2003 = vld [vmem:[#allocation7 + $0x128] sm:$0xff]
    %v2004 = vld [vmem:[#allocation7 + $0x130] sm:$0xff]
    %v2005 = vld [vmem:[#allocation7 + $0x138] sm:$0xff]
    %v2006 = vld [vmem:[#allocation7 + $0x140] sm:$0xff]
    %v2007 = vld [vmem:[#allocation7 + $0x148] sm:$0xff]
    %v2008 = vld [vmem:[#allocation7 + $0x150] sm:$0xff]
    %v2009 = vld [vmem:[#allocation7 + $0x158] sm:$0xff]
    %v2010 = vld [vmem:[#allocation7 + $0x160] sm:$0xff]
    %v2011 = vld [vmem:[#allocation7 + $0x168] sm:$0xff]
    %v2012 = vld [vmem:[#allocation7 + $0x170] sm:$0xff]
    %v2013 = vld [vmem:[#allocation7 + $0x178] sm:$0xff]
    %v2014 = vld [vmem:[#allocation7 + $0x180] sm:$0xff]
    %v2015 = vld [vmem:[#allocation7 + $0x188] sm:$0xff]
    %v2016 = vld [vmem:[#allocation7 + $0x190] sm:$0xff]
    %v2017 = vld [vmem:[#allocation7 + $0x198] sm:$0xff]
    %v2018 = vld [vmem:[#allocation7 + $0x1a0] sm:$0xff]
    %v2019 = vld [vmem:[#allocation7 + $0x1a8] sm:$0xff]
    %v2020 = vld [vmem:[#allocation7 + $0x1b0] sm:$0xff]
    %v2021 = vld [vmem:[#allocation7 + $0x1b8] sm:$0xff]
    %v2022 = vld [vmem:[#allocation7 + $0x1c0] sm:$0xff]
    %v2023 = vld [vmem:[#allocation7 + $0x1c8] sm:$0xff]
    %v2024 = vld [vmem:[#allocation7 + $0x1d0] sm:$0xff]
    %v2025 = vld [vmem:[#allocation7 + $0x1d8] sm:$0xff]
    %v2026 = vld [vmem:[#allocation7 + $0x1e0] sm:$0xff]
    %v2027 = vld [vmem:[#allocation7 + $0x1e8] sm:$0xff]
    %v2028 = vld [vmem:[#allocation7 + $0x1f0] sm:$0xff]
    %v2029 = vld [vmem:[#allocation7 + $0x1f8] sm:$0xff]
    %v2030 = vld [vmem:[%s4] sm:$0x3]
    %v2032 = vlaneseq
    %v2033 = vshrl.u32 %v2032, 7
    %v2034 = vsub.s32 0, %v2033
    %v2035 = vrot.slane %v2030, %v2034
    %v2036 = vlaneseq
    %v2037 = vshrl.u32 %v2036, 7
    %v2038 = vsub.s32 1, %v2037
    %v2039 = vrot.slane %v2030, %v2038
    %v2106 = vunpack.c.l.b16 %v1966
    %v2107 = vunpack.c.h.b16 %v1966
    %v2108 = vunpack.c.l.b16 %v1967
    %v2109 = vunpack.c.h.b16 %v1967
    %v2110 = vunpack.c.l.b16 %v1968
    %v2111 = vunpack.c.h.b16 %v1968
    %v2112 = vunpack.c.l.b16 %v1969
    %v2113 = vunpack.c.h.b16 %v1969
    %v2114 = vunpack.c.l.b16 %v1970
    %v2115 = vunpack.c.h.b16 %v1970
    %v2116 = vunpack.c.l.b16 %v1971
    %v2117 = vunpack.c.h.b16 %v1971
    %v2118 = vunpack.c.l.b16 %v1972
    %v2119 = vunpack.c.h.b16 %v1972
    %v2120 = vunpack.c.l.b16 %v1973
    %v2121 = vunpack.c.h.b16 %v1973
    %v2122 = vunpack.c.l.b16 %v1974
    %v2123 = vunpack.c.h.b16 %v1974
    %v2124 = vunpack.c.l.b16 %v1975
    %v2125 = vunpack.c.h.b16 %v1975
    %v2126 = vunpack.c.l.b16 %v1976
    %v2127 = vunpack.c.h.b16 %v1976
    %v2128 = vunpack.c.l.b16 %v1977
    %v2129 = vunpack.c.h.b16 %v1977
    %v2130 = vunpack.c.l.b16 %v1978
    %v2131 = vunpack.c.h.b16 %v1978
    %v2132 = vunpack.c.l.b16 %v1979
    %v2133 = vunpack.c.h.b16 %v1979
    %v2134 = vunpack.c.l.b16 %v1980
    %v2135 = vunpack.c.h.b16 %v1980
    %v2136 = vunpack.c.l.b16 %v1981
    %v2137 = vunpack.c.h.b16 %v1981
    %v2138 = vunpack.c.l.b16 %v1982
    %v2139 = vunpack.c.h.b16 %v1982
    %v2140 = vunpack.c.l.b16 %v1983
    %v2141 = vunpack.c.h.b16 %v1983
    %v2142 = vunpack.c.l.b16 %v1984
    %v2143 = vunpack.c.h.b16 %v1984
    %v2144 = vunpack.c.l.b16 %v1985
    %v2145 = vunpack.c.h.b16 %v1985
    %v2146 = vunpack.c.l.b16 %v1986
    %v2147 = vunpack.c.h.b16 %v1986
    %v2148 = vunpack.c.l.b16 %v1987
    %v2149 = vunpack.c.h.b16 %v1987
    %v2150 = vunpack.c.l.b16 %v1988
    %v2151 = vunpack.c.h.b16 %v1988
    %v2152 = vunpack.c.l.b16 %v1989
    %v2153 = vunpack.c.h.b16 %v1989
    %v2154 = vunpack.c.l.b16 %v1990
    %v2155 = vunpack.c.h.b16 %v1990
    %v2156 = vunpack.c.l.b16 %v1991
    %v2157 = vunpack.c.h.b16 %v1991
    %v2158 = vunpack.c.l.b16 %v1992
    %v2159 = vunpack.c.h.b16 %v1992
    %v2160 = vunpack.c.l.b16 %v1993
    %v2161 = vunpack.c.h.b16 %v1993
    %v2162 = vunpack.c.l.b16 %v1994
    %v2163 = vunpack.c.h.b16 %v1994
    %v2164 = vunpack.c.l.b16 %v1995
    %v2165 = vunpack.c.h.b16 %v1995
    %v2166 = vunpack.c.l.b16 %v1996
    %v2167 = vunpack.c.h.b16 %v1996
    %v2168 = vunpack.c.l.b16 %v1997
    %v2169 = vunpack.c.h.b16 %v1997
    %v2170 = vunpack.c.l.b16 %v1998
    %v2171 = vunpack.c.h.b16 %v1998
    %v2172 = vunpack.c.l.b16 %v1999
    %v2173 = vunpack.c.h.b16 %v1999
    %v2174 = vunpack.c.l.b16 %v2000
    %v2175 = vunpack.c.h.b16 %v2000
    %v2176 = vunpack.c.l.b16 %v2001
    %v2177 = vunpack.c.h.b16 %v2001
    %v2178 = vunpack.c.l.b16 %v2002
    %v2179 = vunpack.c.h.b16 %v2002
    %v2180 = vunpack.c.l.b16 %v2003
    %v2181 = vunpack.c.h.b16 %v2003
    %v2182 = vunpack.c.l.b16 %v2004
    %v2183 = vunpack.c.h.b16 %v2004
    %v2184 = vunpack.c.l.b16 %v2005
    %v2185 = vunpack.c.h.b16 %v2005
    %v2186 = vunpack.c.l.b16 %v2006
    %v2187 = vunpack.c.h.b16 %v2006
    %v2188 = vunpack.c.l.b16 %v2007
    %v2189 = vunpack.c.h.b16 %v2007
    %v2190 = vunpack.c.l.b16 %v2008
    %v2191 = vunpack.c.h.b16 %v2008
    %v2192 = vunpack.c.l.b16 %v2009
    %v2193 = vunpack.c.h.b16 %v2009
    %v2194 = vunpack.c.l.b16 %v2010
    %v2195 = vunpack.c.h.b16 %v2010
    %v2196 = vunpack.c.l.b16 %v2011
    %v2197 = vunpack.c.h.b16 %v2011
    %v2198 = vunpack.c.l.b16 %v2012
    %v2199 = vunpack.c.h.b16 %v2012
    %v2200 = vunpack.c.l.b16 %v2013
    %v2201 = vunpack.c.h.b16 %v2013
    %v2202 = vunpack.c.l.b16 %v2014
    %v2203 = vunpack.c.h.b16 %v2014
    %v2204 = vunpack.c.l.b16 %v2015
    %v2205 = vunpack.c.h.b16 %v2015
    %v2206 = vunpack.c.l.b16 %v2016
    %v2207 = vunpack.c.h.b16 %v2016
    %v2208 = vunpack.c.l.b16 %v2017
    %v2209 = vunpack.c.h.b16 %v2017
    %v2210 = vunpack.c.l.b16 %v2018
    %v2211 = vunpack.c.h.b16 %v2018
    %v2212 = vunpack.c.l.b16 %v2019
    %v2213 = vunpack.c.h.b16 %v2019
    %v2214 = vunpack.c.l.b16 %v2020
    %v2215 = vunpack.c.h.b16 %v2020
    %v2216 = vunpack.c.l.b16 %v2021
    %v2217 = vunpack.c.h.b16 %v2021
    %v2218 = vunpack.c.l.b16 %v2022
    %v2219 = vunpack.c.h.b16 %v2022
    %v2220 = vunpack.c.l.b16 %v2023
    %v2221 = vunpack.c.h.b16 %v2023
    %v2222 = vunpack.c.l.b16 %v2024
    %v2223 = vunpack.c.h.b16 %v2024
    %v2224 = vunpack.c.l.b16 %v2025
    %v2225 = vunpack.c.h.b16 %v2025
    %v2226 = vunpack.c.l.b16 %v2026
    %v2227 = vunpack.c.h.b16 %v2026
    %v2228 = vunpack.c.l.b16 %v2027
    %v2229 = vunpack.c.h.b16 %v2027
    %v2230 = vunpack.c.l.b16 %v2028
    %v2231 = vunpack.c.h.b16 %v2028
    %v2232 = vunpack.c.l.b16 %v2029
    %v2233 = vunpack.c.h.b16 %v2029
    %v2234 = vpack.c.b16 %v2108, %v2106
    %v2235 = vpack.c.b16 %v2109, %v2107
    %v2236 = vpack.c.b16 %v2112, %v2110
    %v2237 = vpack.c.b16 %v2113, %v2111
    %v2238 = vpack.c.b16 %v2116, %v2114
    %v2239 = vpack.c.b16 %v2117, %v2115
    %v2240 = vpack.c.b16 %v2120, %v2118
    %v2241 = vpack.c.b16 %v2121, %v2119
    %v2242 = vpack.c.b16 %v2124, %v2122
    %v2243 = vpack.c.b16 %v2125, %v2123
    %v2244 = vpack.c.b16 %v2128, %v2126
    %v2245 = vpack.c.b16 %v2129, %v2127
    %v2246 = vpack.c.b16 %v2132, %v2130
    %v2247 = vpack.c.b16 %v2133, %v2131
    %v2248 = vpack.c.b16 %v2136, %v2134
    %v2249 = vpack.c.b16 %v2137, %v2135
    %v2250 = vpack.c.b16 %v2140, %v2138
    %v2251 = vpack.c.b16 %v2141, %v2139
    %v2252 = vpack.c.b16 %v2144, %v2142
    %v2253 = vpack.c.b16 %v2145, %v2143
    %v2254 = vpack.c.b16 %v2148, %v2146
    %v2255 = vpack.c.b16 %v2149, %v2147
    %v2256 = vpack.c.b16 %v2152, %v2150
    %v2257 = vpack.c.b16 %v2153, %v2151
    %v2258 = vpack.c.b16 %v2156, %v2154
    %v2259 = vpack.c.b16 %v2157, %v2155
    %v2260 = vpack.c.b16 %v2160, %v2158
    %v2261 = vpack.c.b16 %v2161, %v2159
    %v2262 = vpack.c.b16 %v2164, %v2162
    %v2263 = vpack.c.b16 %v2165, %v2163
    %v2264 = vpack.c.b16 %v2168, %v2166
    %v2265 = vpack.c.b16 %v2169, %v2167
    %v2266 = vpack.c.b16 %v2172, %v2170
    %v2267 = vpack.c.b16 %v2173, %v2171
    %v2268 = vpack.c.b16 %v2176, %v2174
    %v2269 = vpack.c.b16 %v2177, %v2175
    %v2270 = vpack.c.b16 %v2180, %v2178
    %v2271 = vpack.c.b16 %v2181, %v2179
    %v2272 = vpack.c.b16 %v2184, %v2182
    %v2273 = vpack.c.b16 %v2185, %v2183
    %v2274 = vpack.c.b16 %v2188, %v2186
    %v2275 = vpack.c.b16 %v2189, %v2187
    %v2276 = vpack.c.b16 %v2192, %v2190
    %v2277 = vpack.c.b16 %v2193, %v2191
    %v2278 = vpack.c.b16 %v2196, %v2194
    %v2279 = vpack.c.b16 %v2197, %v2195
    %v2280 = vpack.c.b16 %v2200, %v2198
    %v2281 = vpack.c.b16 %v2201, %v2199
    %v2282 = vpack.c.b16 %v2204, %v2202
    %v2283 = vpack.c.b16 %v2205, %v2203
    %v2284 = vpack.c.b16 %v2208, %v2206
    %v2285 = vpack.c.b16 %v2209, %v2207
    %v2286 = vpack.c.b16 %v2212, %v2210
    %v2287 = vpack.c.b16 %v2213, %v2211
    %v2288 = vpack.c.b16 %v2216, %v2214
    %v2289 = vpack.c.b16 %v2217, %v2215
    %v2290 = vpack.c.b16 %v2220, %v2218
    %v2291 = vpack.c.b16 %v2221, %v2219
    %v2292 = vpack.c.b16 %v2224, %v2222
    %v2293 = vpack.c.b16 %v2225, %v2223
    %v2294 = vpack.c.b16 %v2228, %v2226
    %v2295 = vpack.c.b16 %v2229, %v2227
    %v2296 = vpack.c.b16 %v2232, %v2230
    %v2297 = vpack.c.b16 %v2233, %v2231
    %2362 = vmatprep.subr.bf16.mxu0 %v2235
    %2363 = vmatpush1.bf16.msra.mxu0 %v2234
    %2364 = vmatprep.subr.bf16.mxu0 %v2237
    %2365 = vmatpush1.bf16.msra.mxu0 %v2236
    %2366 = vmatprep.subr.bf16.mxu0 %v2239
    %2367 = vmatpush1.bf16.msra.mxu0 %v2238
    %2368 = vmatprep.subr.bf16.mxu0 %v2241
    %2369 = vmatpush1.bf16.msra.mxu0 %v2240
    %2370 = vmatprep.subr.bf16.mxu0 %v2243
    %2371 = vmatpush1.bf16.msra.mxu0 %v2242
    %2372 = vmatprep.subr.bf16.mxu0 %v2245
    %2373 = vmatpush1.bf16.msra.mxu0 %v2244
    %2374 = vmatprep.subr.bf16.mxu0 %v2247
    %2375 = vmatpush1.bf16.msra.mxu0 %v2246
    %2376 = vmatprep.subr.bf16.mxu0 %v2249
    %2377 = vmatpush1.bf16.msra.mxu0 %v2248
    %2378 = vmatprep.subr.bf16.mxu0 %v2251
    %2379 = vmatpush1.bf16.msra.mxu0 %v2250
    %2380 = vmatprep.subr.bf16.mxu0 %v2253
    %2381 = vmatpush1.bf16.msra.mxu0 %v2252
    %2382 = vmatprep.subr.bf16.mxu0 %v2255
    %2383 = vmatpush1.bf16.msra.mxu0 %v2254
    %2384 = vmatprep.subr.bf16.mxu0 %v2257
    %2385 = vmatpush1.bf16.msra.mxu0 %v2256
    %2386 = vmatprep.subr.bf16.mxu0 %v2259
    %2387 = vmatpush1.bf16.msra.mxu0 %v2258
    %2388 = vmatprep.subr.bf16.mxu0 %v2261
    %2389 = vmatpush1.bf16.msra.mxu0 %v2260
    %2390 = vmatprep.subr.bf16.mxu0 %v2263
    %2391 = vmatpush1.bf16.msra.mxu0 %v2262
    %2392 = vmatprep.subr.bf16.mxu0 %v2265
    %2393 = vmatpush1.bf16.msra.mxu0 %v2264
    %2394 = vmatprep.mubr.bf16.mxu0 %v1963
    %2395 = vmatmul.mubr.bf16.gmra.mrb[0].mxu0 %v1962
    %v2396 = vpop.f32.mrb[0].mxu0
    %v2397 = vadd.f32 %v2035, %v2396
    %v2398 = vpop.f32.mrb[0].mxu0
    %v2399 = vadd.f32 %v2039, %v2398
    %v2400 = vpop.f32.mrb[0].mxu0
    %v2401 = vpop.f32.mrb[0].mxu0
    %2402 = vdwg.mxu0
    %2403 = vmatprep.subr.bf16.mxu0 %v2267
    %2404 = vmatpush1.bf16.msra.mxu0 %v2266
    %2405 = vmatprep.subr.bf16.mxu0 %v2269
    %2406 = vmatpush1.bf16.msra.mxu0 %v2268
    %2407 = vmatprep.subr.bf16.mxu0 %v2271
    %2408 = vmatpush1.bf16.msra.mxu0 %v2270
    %2409 = vmatprep.subr.bf16.mxu0 %v2273
    %2410 = vmatpush1.bf16.msra.mxu0 %v2272
    %2411 = vmatprep.subr.bf16.mxu0 %v2275
    %2412 = vmatpush1.bf16.msra.mxu0 %v2274
    %2413 = vmatprep.subr.bf16.mxu0 %v2277
    %2414 = vmatpush1.bf16.msra.mxu0 %v2276
    %2415 = vmatprep.subr.bf16.mxu0 %v2279
    %2416 = vmatpush1.bf16.msra.mxu0 %v2278
    %2417 = vmatprep.subr.bf16.mxu0 %v2281
    %2418 = vmatpush1.bf16.msra.mxu0 %v2280
    %2419 = vmatprep.subr.bf16.mxu0 %v2283
    %2420 = vmatpush1.bf16.msra.mxu0 %v2282
    %2421 = vmatprep.subr.bf16.mxu0 %v2285
    %2422 = vmatpush1.bf16.msra.mxu0 %v2284
    %2423 = vmatprep.subr.bf16.mxu0 %v2287
    %2424 = vmatpush1.bf16.msra.mxu0 %v2286
    %2425 = vmatprep.subr.bf16.mxu0 %v2289
    %2426 = vmatpush1.bf16.msra.mxu0 %v2288
    %2427 = vmatprep.subr.bf16.mxu0 %v2291
    %2428 = vmatpush1.bf16.msra.mxu0 %v2290
    %2429 = vmatprep.subr.bf16.mxu0 %v2293
    %2430 = vmatpush1.bf16.msra.mxu0 %v2292
    %2431 = vmatprep.subr.bf16.mxu0 %v2295
    %2432 = vmatpush1.bf16.msra.mxu0 %v2294
    %2433 = vmatprep.subr.bf16.mxu0 %v2297
    %2434 = vmatpush1.bf16.msra.mxu0 %v2296
    %2435 = vmatprep.mubr.bf16.mxu0 %v1965
    %2436 = vmatmul.mubr.bf16.gmra.mrb[0].mxu0 %v1964
    %v2437 = vpop.f32.mrb[0].mxu0
    %v2438 = vadd.f32 %v2397, %v2437
    %v2439 = vpop.f32.mrb[0].mxu0
    %v2440 = vadd.f32 %v2399, %v2439
    %v2441 = vpop.f32.mrb[0].mxu0
    %v2442 = vpop.f32.mrb[0].mxu0
    %2443 = vdwg.mxu0
    %v2444 = vmax.f32 %v2438, 0.0
    %v2445 = vmax.f32 %v2440, 0.0
    %v2446 = vpack.c.bf16 %v2444, %v2444
    %v2447 = vpack.c.bf16 %v2445, %v2445
    %v2448 = vld [vmem:[#allocation8] sm:$0xff]
    %v2449 = vld [vmem:[#allocation8 + $0x8] sm:$0xff]
    %v2450 = vld [vmem:[#allocation8 + $0x10] sm:$0xff]
    %v2451 = vld [vmem:[#allocation8 + $0x18] sm:$0xff]
    %v2452 = vld [vmem:[#allocation8 + $0x20] sm:$0xff]
    %v2453 = vld [vmem:[#allocation8 + $0x28] sm:$0xff]
    %v2454 = vld [vmem:[#allocation8 + $0x30] sm:$0xff]
    %v2455 = vld [vmem:[#allocation8 + $0x38] sm:$0xff]
    %v2456 = vld [vmem:[#allocation8 + $0x40] sm:$0xff]
    %v2457 = vld [vmem:[#allocation8 + $0x48] sm:$0xff]
    %v2458 = vld [vmem:[#allocation8 + $0x50] sm:$0xff]
    %v2459 = vld [vmem:[#allocation8 + $0x58] sm:$0xff]
    %v2460 = vld [vmem:[#allocation8 + $0x60] sm:$0xff]
    %v2461 = vld [vmem:[#allocation8 + $0x68] sm:$0xff]
    %v2462 = vld [vmem:[#allocation8 + $0x70] sm:$0xff]
    %v2463 = vld [vmem:[#allocation8 + $0x78] sm:$0xff]
    %v2464 = vld [vmem:[#allocation8 + $0x80] sm:$0xff]
    %v2465 = vld [vmem:[#allocation8 + $0x88] sm:$0xff]
    %v2466 = vld [vmem:[#allocation8 + $0x90] sm:$0xff]
    %v2467 = vld [vmem:[#allocation8 + $0x98] sm:$0xff]
    %v2468 = vld [vmem:[#allocation8 + $0xa0] sm:$0xff]
    %v2469 = vld [vmem:[#allocation8 + $0xa8] sm:$0xff]
    %v2470 = vld [vmem:[#allocation8 + $0xb0] sm:$0xff]
    %v2471 = vld [vmem:[#allocation8 + $0xb8] sm:$0xff]
    %v2472 = vld [vmem:[#allocation8 + $0xc0] sm:$0xff]
    %v2473 = vld [vmem:[#allocation8 + $0xc8] sm:$0xff]
    %v2474 = vld [vmem:[#allocation8 + $0xd0] sm:$0xff]
    %v2475 = vld [vmem:[#allocation8 + $0xd8] sm:$0xff]
    %v2476 = vld [vmem:[#allocation8 + $0xe0] sm:$0xff]
    %v2477 = vld [vmem:[#allocation8 + $0xe8] sm:$0xff]
    %v2478 = vld [vmem:[#allocation8 + $0xf0] sm:$0xff]
    %v2479 = vld [vmem:[#allocation8 + $0xf8] sm:$0xff]
    %v2480 = vld [vmem:[%s6] sm:$0x3]
    %v2482 = vlaneseq
    %v2483 = vshrl.u32 %v2482, 7
    %v2484 = vsub.s32 0, %v2483
    %v2485 = vrot.slane %v2480, %v2484
    %v2486 = vlaneseq
    %v2487 = vshrl.u32 %v2486, 7
    %v2488 = vsub.s32 1, %v2487
    %v2489 = vrot.slane %v2480, %v2488
    %v2524 = vunpack.c.l.b16 %v2448
    %v2525 = vunpack.c.h.b16 %v2448
    %v2526 = vunpack.c.l.b16 %v2449
    %v2527 = vunpack.c.h.b16 %v2449
    %v2528 = vunpack.c.l.b16 %v2450
    %v2529 = vunpack.c.h.b16 %v2450
    %v2530 = vunpack.c.l.b16 %v2451
    %v2531 = vunpack.c.h.b16 %v2451
    %v2532 = vunpack.c.l.b16 %v2452
    %v2533 = vunpack.c.h.b16 %v2452
    %v2534 = vunpack.c.l.b16 %v2453
    %v2535 = vunpack.c.h.b16 %v2453
    %v2536 = vunpack.c.l.b16 %v2454
    %v2537 = vunpack.c.h.b16 %v2454
    %v2538 = vunpack.c.l.b16 %v2455
    %v2539 = vunpack.c.h.b16 %v2455
    %v2540 = vunpack.c.l.b16 %v2456
    %v2541 = vunpack.c.h.b16 %v2456
    %v2542 = vunpack.c.l.b16 %v2457
    %v2543 = vunpack.c.h.b16 %v2457
    %v2544 = vunpack.c.l.b16 %v2458
    %v2545 = vunpack.c.h.b16 %v2458
    %v2546 = vunpack.c.l.b16 %v2459
    %v2547 = vunpack.c.h.b16 %v2459
    %v2548 = vunpack.c.l.b16 %v2460
    %v2549 = vunpack.c.h.b16 %v2460
    %v2550 = vunpack.c.l.b16 %v2461
    %v2551 = vunpack.c.h.b16 %v2461
    %v2552 = vunpack.c.l.b16 %v2462
    %v2553 = vunpack.c.h.b16 %v2462
    %v2554 = vunpack.c.l.b16 %v2463
    %v2555 = vunpack.c.h.b16 %v2463
    %v2556 = vunpack.c.l.b16 %v2464
    %v2557 = vunpack.c.h.b16 %v2464
    %v2558 = vunpack.c.l.b16 %v2465
    %v2559 = vunpack.c.h.b16 %v2465
    %v2560 = vunpack.c.l.b16 %v2466
    %v2561 = vunpack.c.h.b16 %v2466
    %v2562 = vunpack.c.l.b16 %v2467
    %v2563 = vunpack.c.h.b16 %v2467
    %v2564 = vunpack.c.l.b16 %v2468
    %v2565 = vunpack.c.h.b16 %v2468
    %v2566 = vunpack.c.l.b16 %v2469
    %v2567 = vunpack.c.h.b16 %v2469
    %v2568 = vunpack.c.l.b16 %v2470
    %v2569 = vunpack.c.h.b16 %v2470
    %v2570 = vunpack.c.l.b16 %v2471
    %v2571 = vunpack.c.h.b16 %v2471
    %v2572 = vunpack.c.l.b16 %v2472
    %v2573 = vunpack.c.h.b16 %v2472
    %v2574 = vunpack.c.l.b16 %v2473
    %v2575 = vunpack.c.h.b16 %v2473
    %v2576 = vunpack.c.l.b16 %v2474
    %v2577 = vunpack.c.h.b16 %v2474
    %v2578 = vunpack.c.l.b16 %v2475
    %v2579 = vunpack.c.h.b16 %v2475
    %v2580 = vunpack.c.l.b16 %v2476
    %v2581 = vunpack.c.h.b16 %v2476
    %v2582 = vunpack.c.l.b16 %v2477
    %v2583 = vunpack.c.h.b16 %v2477
    %v2584 = vunpack.c.l.b16 %v2478
    %v2585 = vunpack.c.h.b16 %v2478
    %v2586 = vunpack.c.l.b16 %v2479
    %v2587 = vunpack.c.h.b16 %v2479
    %v2588 = vpack.c.b16 %v2526, %v2524
    %v2589 = vpack.c.b16 %v2527, %v2525
    %v2590 = vpack.c.b16 %v2530, %v2528
    %v2591 = vpack.c.b16 %v2531, %v2529
    %v2592 = vpack.c.b16 %v2534, %v2532
    %v2593 = vpack.c.b16 %v2535, %v2533
    %v2594 = vpack.c.b16 %v2538, %v2536
    %v2595 = vpack.c.b16 %v2539, %v2537
    %v2596 = vpack.c.b16 %v2542, %v2540
    %v2597 = vpack.c.b16 %v2543, %v2541
    %v2598 = vpack.c.b16 %v2546, %v2544
    %v2599 = vpack.c.b16 %v2547, %v2545
    %v2600 = vpack.c.b16 %v2550, %v2548
    %v2601 = vpack.c.b16 %v2551, %v2549
    %v2602 = vpack.c.b16 %v2554, %v2552
    %v2603 = vpack.c.b16 %v2555, %v2553
    %v2604 = vpack.c.b16 %v2558, %v2556
    %v2605 = vpack.c.b16 %v2559, %v2557
    %v2606 = vpack.c.b16 %v2562, %v2560
    %v2607 = vpack.c.b16 %v2563, %v2561
    %v2608 = vpack.c.b16 %v2566, %v2564
    %v2609 = vpack.c.b16 %v2567, %v2565
    %v2610 = vpack.c.b16 %v2570, %v2568
    %v2611 = vpack.c.b16 %v2571, %v2569
    %v2612 = vpack.c.b16 %v2574, %v2572
    %v2613 = vpack.c.b16 %v2575, %v2573
    %v2614 = vpack.c.b16 %v2578, %v2576
    %v2615 = vpack.c.b16 %v2579, %v2577
    %v2616 = vpack.c.b16 %v2582, %v2580
    %v2617 = vpack.c.b16 %v2583, %v2581
    %v2618 = vpack.c.b16 %v2586, %v2584
    %v2619 = vpack.c.b16 %v2587, %v2585
    %2652 = vmatprep.subr.bf16.mxu0 %v2589
    %2653 = vmatpush1.bf16.msra.mxu0 %v2588
    %2654 = vmatprep.subr.bf16.mxu0 %v2591
    %2655 = vmatpush1.bf16.msra.mxu0 %v2590
    %2656 = vmatprep.subr.bf16.mxu0 %v2593
    %2657 = vmatpush1.bf16.msra.mxu0 %v2592
    %2658 = vmatprep.subr.bf16.mxu0 %v2595
    %2659 = vmatpush1.bf16.msra.mxu0 %v2594
    %2660 = vmatprep.subr.bf16.mxu0 %v2597
    %2661 = vmatpush1.bf16.msra.mxu0 %v2596
    %2662 = vmatprep.subr.bf16.mxu0 %v2599
    %2663 = vmatpush1.bf16.msra.mxu0 %v2598
    %2664 = vmatprep.subr.bf16.mxu0 %v2601
    %2665 = vmatpush1.bf16.msra.mxu0 %v2600
    %2666 = vmatprep.subr.bf16.mxu0 %v2603
    %2667 = vmatpush1.bf16.msra.mxu0 %v2602
    %2668 = vmatprep.subr.bf16.mxu0 %v2605
    %2669 = vmatpush1.bf16.msra.mxu0 %v2604
    %2670 = vmatprep.subr.bf16.mxu0 %v2607
    %2671 = vmatpush1.bf16.msra.mxu0 %v2606
    %2672 = vmatprep.subr.bf16.mxu0 %v2609
    %2673 = vmatpush1.bf16.msra.mxu0 %v2608
    %2674 = vmatprep.subr.bf16.mxu0 %v2611
    %2675 = vmatpush1.bf16.msra.mxu0 %v2610
    %2676 = vmatprep.subr.bf16.mxu0 %v2613
    %2677 = vmatpush1.bf16.msra.mxu0 %v2612
    %2678 = vmatprep.subr.bf16.mxu0 %v2615
    %2679 = vmatpush1.bf16.msra.mxu0 %v2614
    %2680 = vmatprep.subr.bf16.mxu0 %v2617
    %2681 = vmatpush1.bf16.msra.mxu0 %v2616
    %2682 = vmatprep.subr.bf16.mxu0 %v2619
    %2683 = vmatpush1.bf16.msra.mxu0 %v2618
    %2684 = vmatprep.mubr.bf16.mxu0 %v2447
    %2685 = vmatmul.mubr.bf16.gmra.mrb[0].mxu0 %v2446
    %v2686 = vpop.f32.mrb[0].mxu0
    %v2687 = vadd.f32 %v2485, %v2686
    %v2688 = vpop.f32.mrb[0].mxu0
    %v2689 = vadd.f32 %v2489, %v2688
    %v2690 = vpop.f32.mrb[0].mxu0
    %v2691 = vpop.f32.mrb[0].mxu0
    %2692 = vdwg.mxu0
    %2693 = vst [vmem:[#allocation10] sm:$0xff] %v2687
    %v2694 = vmax.f32 %v2689, -20.0
    %v2695 = vmin.f32 %v2694, 2.0
    %2696 = vst [vmem:[#allocation10 + $0x8] sm:$0xff] %v2695
    // Predicated region
    $region46: #{tpu_custom_call.1} parent=1 // pred_check
      _
    $region47: #{tpu_custom_call.1} parent=1 // pred_check_branch
      %2698 = sbr.rel (0) target = $region49
    $region48: #{tpu_custom_call.1} parent=1 // pred_region
      %s2700 = ssub.s32 256, 256
      %2701 = vsyncadd [#allocation4], %s2700
      %s2703 = sshll.u32 [#allocation10], 4
      %s2704 = int_to_ptr.vmem [resolvable:$true] %s2703
      %2706 = dma.vmem_to_hbm [thread:$0]  %s2704, 256, %s7, [#allocation4]
    $region49: #{tpu_custom_call.1} parent=1 // pred_fallthru
      _
    // Predicated region
    $region50: #{tpu_custom_call.1} parent=1 // pred_check
      _
    $region51: #{tpu_custom_call.1} parent=1 // pred_check_branch
      %2708 = sbr.rel (0) target = $region53
    $region52: #{tpu_custom_call.1} parent=1 // pred_region
      %2709 = dma.done [#allocation4], 256
    $region53: #{tpu_custom_call.1} parent=1 // pred_fallthru
      _
    %2710 = vsyncpa [#allocation3], 1
    %2711 = vsyncpa [#allocation6], 1
    %2712 = vsyncpa [#allocation9], 1
    %2713 = vsyncpa [#allocation4], 1

</llo_original>
